<compile_context>
chip_gen: v7x
topology: tpu7x:2x2x1
jax: 0.10.0
libtpu: 0.0.40
codegen_flags: <defaults>
</compile_context>

<pallas_src>
import jax
import jax.numpy as jnp
from jax import lax
from jax.experimental import pallas as pl
from jax.experimental.pallas import tpu as pltpu

EPS = 1e-5


def _round_up(x, m):
    return (x + m - 1) // m * m


def _bn_relu_lane_dense(acc, g_ref, be_ref, inv_cnt):
    """Training-mode BatchNorm + ReLU on a lane-dense (rows, W*C) f32 value.

    Per-channel stats are reduced over all rows and over the W lane groups via
    a 0/1 group-sum matrix G (lane p contributes to channel p % C), and the
    per-channel scale/shift are broadcast back with G^T.  Everything stays f32.
    """
    C = g_ref.shape[1]
    WC = acc.shape[1]

    # Per-lane sums over the row (sublane) axis.
    s_lane = jnp.sum(acc, axis=0, keepdims=True)              # (1, WC)
    ss_lane = jnp.sum(acc * acc, axis=0, keepdims=True)       # (1, WC)

    # Group-sum matrix: G[p, c] = 1 iff p % C == c   (tiny MXU op).
    g_row = lax.broadcasted_iota(jnp.int32, (WC, C), 0) % C
    g_col = lax.broadcasted_iota(jnp.int32, (WC, C), 1)
    G = (g_row == g_col).astype(jnp.float32)                   # (WC, C)
    s_ch = jnp.dot(s_lane, G, preferred_element_type=jnp.float32)   # (1, C)
    ss_ch = jnp.dot(ss_lane, G, preferred_element_type=jnp.float32)

    mean = s_ch * inv_cnt
    var = ss_ch * inv_cnt - mean * mean                        # biased variance
    scale = g_ref[...] * lax.rsqrt(var + EPS)                  # (1, C)
    shift = be_ref[...] - mean * scale

    # Broadcast per-channel scale/shift back to the W*C lane layout with G^T.
    t_col = lax.broadcasted_iota(jnp.int32, (C, WC), 1) % C
    t_row = lax.broadcasted_iota(jnp.int32, (C, WC), 0)
    Gt = (t_col == t_row).astype(jnp.float32)                  # (C, WC)
    scale_l = jnp.dot(scale, Gt, preferred_element_type=jnp.float32)  # (1, WC)
    shift_l = jnp.dot(shift, Gt, preferred_element_type=jnp.float32)

    return jnp.maximum(acc * scale_l + shift_l, 0.0)


def _vgg_block_kernel(x_ref, wb1_ref, g1_ref, be1_ref, wb2_ref, g2_ref, be2_ref,
                      o_ref, xpad_ref, hpad_ref):
    """Whole VGGBlock forward, everything lane-dense and VMEM resident.

    x_ref   : [N, H, W*Cin]            input, lane-dense rows
    wb*_ref : [3, LC, W*C]   bf16      banded conv weights (one slab per dy)
    g*/be*  : [1, C]         f32       BN gamma / beta
    o_ref   : [N*H, W*Cout]  f32       lane-dense output
    xpad_ref: VMEM [N, H+2, LC1] f32   padded input slab (pad cols at lane tail)
    hpad_ref: VMEM [N, H+2, LC2] f32   padded intermediate slab
    """
    N, H, WCin = x_ref.shape
    _, Hp, LC1 = xpad_ref.shape
    _, _, LC2 = hpad_ref.shape
    WCmid = wb1_ref.shape[2]
    WCout = wb2_ref.shape[2]
    Cmid = g1_ref.shape[1]
    NH = N * H
    W = WCmid // Cmid
    inv_cnt = 1.0 / float(NH * W)

    # ---- pad input: one full-slab zero, then a lane-aligned interior store ----
    xpad_ref[...] = jnp.zeros(xpad_ref.shape, xpad_ref.dtype)
    xpad_ref[:, 1:H + 1, 0:WCin] = x_ref[...]

    # ---- conv1: 3 banded matmuls (one per dy), bf16 in, f32 accumulate -------
    acc1 = jnp.zeros((NH, WCmid), jnp.float32)
    for dy in range(3):
        lhs = xpad_ref[:, dy:dy + H, :].reshape(NH, LC1).astype(jnp.bfloat16)
        acc1 = acc1 + jnp.dot(lhs, wb1_ref[dy],
                              preferred_element_type=jnp.float32)
    # conv bias omitted: cancelled exactly by the BN mean subtraction.

    # ---- bn1 + relu -----------------------------------------------------------
    h1 = _bn_relu_lane_dense(acc1, g1_ref, be1_ref, inv_cnt)      # (NH, WCmid)

    # ---- re-pad intermediate --------------------------------------------------
    hpad_ref[...] = jnp.zeros(hpad_ref.shape, hpad_ref.dtype)
    hpad_ref[:, 1:H + 1, 0:WCmid] = h1.reshape(N, H, WCmid)

    # ---- conv2 ----------------------------------------------------------------
    acc2 = jnp.zeros((NH, WCout), jnp.float32)
    for dy in range(3):
        lhs = hpad_ref[:, dy:dy + H, :].reshape(NH, LC2).astype(jnp.bfloat16)
        acc2 = acc2 + jnp.dot(lhs, wb2_ref[dy],
                              preferred_element_type=jnp.float32)

    # ---- bn2 + relu + lane-dense store ---------------------------------------
    o_ref[...] = _bn_relu_lane_dense(acc2, g2_ref, be2_ref, inv_cnt)


def _banded_weights(w_hwio, w_spatial, lanes_padded):
    """HWIO (3,3,Ci,Co) conv kernel -> (3, lanes_padded, W*Co) banded matmuls.

    For each kernel row dy, output[(n,h), w*Co+co] = lhs_dy[(n,h), :] @ B[dy]
    where lhs_dy is the dy-shifted lane-dense padded row slab.  Lane position
    p holds padded column perm[p] (interior columns first so interior stores
    in the kernel are lane-aligned; the two pad columns sit at the tail).
    """
    KH, KW, Ci, Co = w_hwio.shape
    Wp = w_spatial + 2
    wp_idx = jnp.arange(Wp)[:, None]            # padded column index
    w_idx = jnp.arange(w_spatial)[None, :]      # output column index
    dx = wp_idx - w_idx                         # (Wp, W)
    valid = (dx >= 0) & (dx < KW)
    dx_c = jnp.clip(dx, 0, KW - 1)
    gath = w_hwio[:, dx_c, :, :]                # (KH, Wp, W, Ci, Co)
    gath = jnp.where(valid[None, :, :, None, None], gath, 0.0)
    b = jnp.transpose(gath, (0, 1, 3, 2, 4))    # (KH, Wp, Ci, W, Co)
    perm = list(range(1, w_spatial + 1)) + [0, w_spatial + 1]
    b = b[:, jnp.asarray(perm)]                 # interior-first column order
    b = b.reshape(KH, Wp * Ci, w_spatial * Co)
    out = jnp.zeros((KH, lanes_padded, w_spatial * Co), w_hwio.dtype)
    return out.at[:, :Wp * Ci, :].set(b)


def vgg_block(x_nchw, params):
    """VGGBlock forward. x_nchw: [N, Cin, H, W] -> [N, Cout, H, W]."""
    x = jnp.transpose(x_nchw, (0, 2, 3, 1)).astype(jnp.float32)   # NHWC
    N, H, W, Cin = x.shape
    Cmid = params["w1"].shape[3]
    Cout = params["w2"].shape[3]
    Hp = H + 2
    LC1 = _round_up((W + 2) * Cin, 128)
    LC2 = _round_up((W + 2) * Cmid, 128)

    x2d = x.reshape(N, H, W * Cin)                                 # lane-dense
    wb1 = _banded_weights(params["w1"].astype(jnp.float32), W, LC1
                          ).astype(jnp.bfloat16)
    wb2 = _banded_weights(params["w2"].astype(jnp.float32), W, LC2
                          ).astype(jnp.bfloat16)

    flops = 2 * N * H * (3 * LC1) * (W * Cmid) + 2 * N * H * (3 * LC2) * (W * Cout)
    bytes_accessed = (x2d.size * 4 + wb1.size * 2 + wb2.size * 2
                      + N * H * W * Cout * 4 + 4 * (Cmid + Cout) * 4)
    cost = pl.CostEstimate(flops=flops, transcendentals=Cmid + Cout,
                           bytes_accessed=bytes_accessed)

    try:                                     # 64 MiB on v7x, 128 MiB on v5e/v6e
        vmem_cap = int(pltpu.get_tpu_info().vmem_capacity_bytes)
    except Exception:
        vmem_cap = 64 * 1024 * 1024
    vmem_limit = int(min(vmem_cap * 3 // 4, 100 * 1024 * 1024))

    vmem = pl.BlockSpec(memory_space=pltpu.MemorySpace.VMEM)
    out2d = pl.pallas_call(
        _vgg_block_kernel,
        out_shape=jax.ShapeDtypeStruct((N * H, W * Cout), jnp.float32),
        in_specs=[vmem] * 7,
        out_specs=vmem,
        scratch_shapes=[
            pltpu.VMEM((N, Hp, LC1), jnp.float32),   # padded input slab
            pltpu.VMEM((N, Hp, LC2), jnp.float32),   # padded intermediate slab
        ],
        compiler_params=pltpu.CompilerParams(vmem_limit_bytes=vmem_limit),
        cost_estimate=cost,
    )(x2d, wb1, params["g1"], params["be1"], wb2, params["g2"], params["be2"])

    out = out2d.reshape(N, H, W, Cout)
    return jnp.transpose(out, (0, 3, 1, 2))                        # back to NCHW


def make_params(key, in_ch, mid_ch, out_ch):
    """Deterministic synthetic parameters (shapes match nn.Conv2d / nn.BatchNorm2d)."""
    k1, k2, k3, k4 = jax.random.split(key, 4)
    return {
        "w1": 0.1 * jax.random.normal(k1, (3, 3, in_ch, mid_ch), jnp.float32),
        "b1": 0.01 * jax.random.normal(k2, (1, mid_ch), jnp.float32),
        "g1": (1.0 + 0.05 * jnp.arange(mid_ch, dtype=jnp.float32)).reshape(1, mid_ch),
        "be1": (0.02 * jnp.arange(mid_ch, dtype=jnp.float32)).reshape(1, mid_ch),
        "w2": 0.1 * jax.random.normal(k3, (3, 3, mid_ch, out_ch), jnp.float32),
        "b2": 0.01 * jax.random.normal(k4, (1, out_ch), jnp.float32),
        "g2": (1.0 + 0.03 * jnp.arange(out_ch, dtype=jnp.float32)).reshape(1, out_ch),
        "be2": (-0.01 * jnp.arange(out_ch, dtype=jnp.float32)).reshape(1, out_ch),
    }


def ref_vgg_block(x_nchw, p, matmul_dtype=jnp.float32):
    """Plain-JAX reference.  matmul_dtype=bfloat16 mimics the kernel's MXU inputs."""
    def cast(a):
        return a.astype(matmul_dtype).astype(jnp.float32)

    def conv(x, w, b):
        y = lax.conv_general_dilated(
            cast(x), cast(w), window_strides=(1, 1), padding="SAME",
            dimension_numbers=("NHWC", "HWIO", "NHWC"),
            precision=lax.Precision.HIGHEST)
        return y + b.reshape(1, 1, 1, -1)

    def bn(x, g, be):
        m = x.mean(axis=(0, 1, 2), keepdims=True)
        v = ((x - m) ** 2).mean(axis=(0, 1, 2), keepdims=True)
        return (x - m) * lax.rsqrt(v + EPS) * g.reshape(1, 1, 1, -1) \
            + be.reshape(1, 1, 1, -1)

    x = jnp.transpose(x_nchw, (0, 2, 3, 1)).astype(jnp.float32)
    h = jnp.maximum(bn(conv(x, p["w1"], p["b1"][0]), p["g1"][0], p["be1"][0]), 0.0)
    h = jnp.maximum(bn(conv(h, p["w2"], p["b2"][0]), p["g2"][0], p["be2"][0]), 0.0)
    return jnp.transpose(h, (0, 3, 1, 2))


if __name__ == "__main__":
    # Small shapes consistent with VGGBlock(in=4, middle=8, out=8) on 2x4x16x16.
    N, Cin, Cmid, Cout, H, W = 2, 4, 8, 8, 16, 16

    key = jax.random.PRNGKey(0)
    kx, kp = jax.random.split(key)
    x = jax.random.normal(kx, (N, Cin, H, W), jnp.float32)
    params = make_params(kp, Cin, Cmid, Cout)

    out = jax.block_until_ready(vgg_block(x, params))
    assert out.shape == (N, Cout, H, W), out.shape

    # Tight check against a reference whose conv inputs/weights are rounded to
    # bf16 like the kernel's MXU operands (everything else f32).
    ref_bf16 = jax.block_until_ready(ref_vgg_block(x, params, jnp.bfloat16))
    assert jnp.allclose(out, ref_bf16, rtol=1e-2, atol=5e-3), \
        float(jnp.max(jnp.abs(out - ref_bf16)))

    # Looser check against the pure-f32 module semantics (difference = bf16
    # MXU inputs only).
    ref_f32 = jax.block_until_ready(ref_vgg_block(x, params, jnp.float32))
    assert jnp.allclose(out, ref_f32, rtol=2e-2, atol=2e-2), \
        float(jnp.max(jnp.abs(out - ref_f32)))

    print("KERNEL_OK")
</pallas_src>

<mosaic_0001>
module attributes {stable_mosaic.version = 11 : i64} {
  func.func @_vgg_block_kernel(%arg0: memref<2x16x64xf32, #tpu.memory_space<vmem>>, %arg1: memref<3x128x128xbf16, #tpu.memory_space<vmem>>, %arg2: memref<1x8xf32, #tpu.memory_space<vmem>>, %arg3: memref<1x8xf32, #tpu.memory_space<vmem>>, %arg4: memref<3x256x128xbf16, #tpu.memory_space<vmem>>, %arg5: memref<1x8xf32, #tpu.memory_space<vmem>>, %arg6: memref<1x8xf32, #tpu.memory_space<vmem>>, %arg7: memref<32x128xf32, #tpu.memory_space<vmem>>, %arg8: memref<2x18x128xf32, #tpu.memory_space<vmem>>, %arg9: memref<2x18x256xf32, #tpu.memory_space<vmem>>) attributes {dimension_semantics = [], scalar_prefetch = 0 : i64, scratch_operands = 2 : i64, tpu.core_type = #tpu.core_type<tc>} {
    %cst = arith.constant 0.000000e+00 : f32
    %0 = vector.broadcast %cst : f32 to vector<2x18x128xf32>
    %c0 = arith.constant 0 : index
    %c0_0 = arith.constant 0 : index
    %c0_1 = arith.constant 0 : index
    %1 = vector.load %arg8[%c0, %c0_0, %c0_1] : memref<2x18x128xf32, #tpu.memory_space<vmem>>, vector<2x18x128xf32>
    tpu.vector_store %arg8[%c0, %c0_0, %c0_1], %0 {strides = array<i32>} : memref<2x18x128xf32, #tpu.memory_space<vmem>>, vector<2x18x128xf32>,
    %c0_2 = arith.constant 0 : index
    %c0_3 = arith.constant 0 : index
    %c0_4 = arith.constant 0 : index
    %2 = vector.load %arg0[%c0_2, %c0_3, %c0_4] : memref<2x16x64xf32, #tpu.memory_space<vmem>>, vector<2x16x64xf32>
    %c0_5 = arith.constant 0 : index
    %c1 = arith.constant 1 : index
    %c0_6 = arith.constant 0 : index
    %3 = vector.load %arg8[%c0_5, %c1, %c0_6] : memref<2x18x128xf32, #tpu.memory_space<vmem>>, vector<2x16x64xf32>
    tpu.vector_store %arg8[%c0_5, %c1, %c0_6], %2 {strides = array<i32>} : memref<2x18x128xf32, #tpu.memory_space<vmem>>, vector<2x16x64xf32>,
    %cst_7 = arith.constant 0.000000e+00 : f32
    %4 = vector.broadcast %cst_7 : f32 to vector<32x128xf32>
    %c0_8 = arith.constant 0 : index
    %c0_9 = arith.constant 0 : index
    %c0_10 = arith.constant 0 : index
    %5 = vector.load %arg8[%c0_8, %c0_9, %c0_10] : memref<2x18x128xf32, #tpu.memory_space<vmem>>, vector<2x16x128xf32>
    %6 = vector.shape_cast %5 : vector<2x16x128xf32> to vector<32x128xf32>
    %7 = arith.truncf %6 : vector<32x128xf32> to vector<32x128xbf16>
    %c0_11 = arith.constant 0 : index
    %c0_12 = arith.constant 0 : index
    %c0_13 = arith.constant 0 : index
    %8 = vector.load %arg1[%c0_11, %c0_12, %c0_13] : memref<3x128x128xbf16, #tpu.memory_space<vmem>>, vector<1x128x128xbf16>
    %9 = vector.shape_cast %8 : vector<1x128x128xbf16> to vector<128x128xbf16>
    %cst_14 = arith.constant dense<0.000000e+00> : vector<32x128xf32>
    %10 = tpu.matmul %7, %9, %cst_14 {dimension_numbers = #tpu.dot_dimension_numbers<[1], [0], [0], [1], [0, 0, 1, 1], [], []>} : vector<32x128xbf16>, vector<128x128xbf16>, vector<32x128xf32> -> vector<32x128xf32>
    %11 = arith.addf %4, %10 : vector<32x128xf32>
    %c0_15 = arith.constant 0 : index
    %c1_16 = arith.constant 1 : index
    %c0_17 = arith.constant 0 : index
    %12 = vector.load %arg8[%c0_15, %c1_16, %c0_17] : memref<2x18x128xf32, #tpu.memory_space<vmem>>, vector<2x16x128xf32>
    %13 = vector.shape_cast %12 : vector<2x16x128xf32> to vector<32x128xf32>
    %14 = arith.truncf %13 : vector<32x128xf32> to vector<32x128xbf16>
    %c1_18 = arith.constant 1 : index
    %c0_19 = arith.constant 0 : index
    %c0_20 = arith.constant 0 : index
    %15 = vector.load %arg1[%c1_18, %c0_19, %c0_20] : memref<3x128x128xbf16, #tpu.memory_space<vmem>>, vector<1x128x128xbf16>
    %16 = vector.shape_cast %15 : vector<1x128x128xbf16> to vector<128x128xbf16>
    %cst_21 = arith.constant dense<0.000000e+00> : vector<32x128xf32>
    %17 = tpu.matmul %14, %16, %cst_21 {dimension_numbers = #tpu.dot_dimension_numbers<[1], [0], [0], [1], [0, 0, 1, 1], [], []>} : vector<32x128xbf16>, vector<128x128xbf16>, vector<32x128xf32> -> vector<32x128xf32>
    %18 = arith.addf %11, %17 : vector<32x128xf32>
    %c0_22 = arith.constant 0 : index
    %c2 = arith.constant 2 : index
    %c0_23 = arith.constant 0 : index
    %19 = vector.load %arg8[%c0_22, %c2, %c0_23] : memref<2x18x128xf32, #tpu.memory_space<vmem>>, vector<2x16x128xf32>
    %20 = vector.shape_cast %19 : vector<2x16x128xf32> to vector<32x128xf32>
    %21 = arith.truncf %20 : vector<32x128xf32> to vector<32x128xbf16>
    %c2_24 = arith.constant 2 : index
    %c0_25 = arith.constant 0 : index
    %c0_26 = arith.constant 0 : index
    %22 = vector.load %arg1[%c2_24, %c0_25, %c0_26] : memref<3x128x128xbf16, #tpu.memory_space<vmem>>, vector<1x128x128xbf16>
    %23 = vector.shape_cast %22 : vector<1x128x128xbf16> to vector<128x128xbf16>
    %cst_27 = arith.constant dense<0.000000e+00> : vector<32x128xf32>
    %24 = tpu.matmul %21, %23, %cst_27 {dimension_numbers = #tpu.dot_dimension_numbers<[1], [0], [0], [1], [0, 0, 1, 1], [], []>} : vector<32x128xbf16>, vector<128x128xbf16>, vector<32x128xf32> -> vector<32x128xf32>
    %25 = arith.addf %18, %24 : vector<32x128xf32>
    %cst_28 = arith.constant dense<0.000000e+00> : vector<128xf32>
    %26 = vector.multi_reduction <add>, %25, %cst_28 [0] : vector<32x128xf32> to vector<128xf32>
    %27 = vector.shape_cast %26 : vector<128xf32> to vector<1x128xf32>
    %28 = arith.mulf %25, %25 : vector<32x128xf32>
    %cst_29 = arith.constant dense<0.000000e+00> : vector<128xf32>
    %29 = vector.multi_reduction <add>, %28, %cst_29 [0] : vector<32x128xf32> to vector<128xf32>
    %30 = vector.shape_cast %29 : vector<128xf32> to vector<1x128xf32>
    %31 = tpu.iota {dimensions = array<i32: 0>} : vector<128x8xi32>
    %c8_i32 = arith.constant 8 : i32
    %c0_i32 = arith.constant 0 : i32
    %32 = arith.cmpi eq, %c8_i32, %c0_i32 : i32
    %c1_i32 = arith.constant 1 : i32
    %33 = arith.select %32, %c1_i32, %c8_i32 : i32
    %34 = vector.broadcast %33 : i32 to vector<128x8xi32>
    %35 = arith.remsi %31, %34 : vector<128x8xi32>
    %c0_i32_30 = arith.constant 0 : i32
    %36 = vector.broadcast %c0_i32_30 : i32 to vector<128x8xi32>
    %37 = arith.cmpi ne, %35, %36 : vector<128x8xi32>
    %c0_i32_31 = arith.constant 0 : i32
    %38 = vector.broadcast %c0_i32_31 : i32 to vector<128x8xi32>
    %39 = arith.cmpi slt, %35, %38 : vector<128x8xi32>
    %c0_i32_32 = arith.constant 0 : i32
    %40 = arith.cmpi slt, %33, %c0_i32_32 : i32
    %41 = vector.broadcast %40 : i1 to vector<128x8xi1>
    %42 = vector.broadcast %41 : vector<128x8xi1> to vector<128x8xi1>
    %43 = arith.xori %39, %42 : vector<128x8xi1>
    %44 = arith.andi %43, %37 : vector<128x8xi1>
    %45 = vector.broadcast %33 : i32 to vector<128x8xi32>
    %46 = arith.addi %35, %45 : vector<128x8xi32>
    %47 = arith.select %44, %46, %35 : vector<128x8xi1>, vector<128x8xi32>
    %48 = tpu.iota {dimensions = array<i32: 1>} : vector<128x8xi32>
    %49 = arith.cmpi eq, %47, %48 : vector<128x8xi32>
    %50 = arith.extui %49 : vector<128x8xi1> to vector<128x8xi32>
    %51 = arith.sitofp %50 : vector<128x8xi32> to vector<128x8xf32>
    %cst_33 = arith.constant dense<0.000000e+00> : vector<1x8xf32>
    %52 = tpu.matmul %27, %51, %cst_33 {dimension_numbers = #tpu.dot_dimension_numbers<[1], [0], [0], [1], [0, 0, 1, 1], [], []>} : vector<1x128xf32>, vector<128x8xf32>, vector<1x8xf32> -> vector<1x8xf32>
    %cst_34 = arith.constant dense<0.000000e+00> : vector<1x8xf32>
    %53 = tpu.matmul %30, %51, %cst_34 {dimension_numbers = #tpu.dot_dimension_numbers<[1], [0], [0], [1], [0, 0, 1, 1], [], []>} : vector<1x128xf32>, vector<128x8xf32>, vector<1x8xf32> -> vector<1x8xf32>
    %cst_35 = arith.constant 0.001953125 : f32
    %54 = vector.broadcast %cst_35 : f32 to vector<1x8xf32>
    %55 = arith.mulf %52, %54 : vector<1x8xf32>
    %cst_36 = arith.constant 0.001953125 : f32
    %56 = vector.broadcast %cst_36 : f32 to vector<1x8xf32>
    %57 = arith.mulf %53, %56 : vector<1x8xf32>
    %58 = arith.mulf %55, %55 : vector<1x8xf32>
    %59 = arith.subf %57, %58 : vector<1x8xf32>
    %c0_37 = arith.constant 0 : index
    %c0_38 = arith.constant 0 : index
    %60 = vector.load %arg2[%c0_37, %c0_38] : memref<1x8xf32, #tpu.memory_space<vmem>>, vector<1x8xf32>
    %cst_39 = arith.constant 9.99999974E-6 : f32
    %61 = vector.broadcast %cst_39 : f32 to vector<1x8xf32>
    %62 = arith.addf %59, %61 : vector<1x8xf32>
    %63 = math.rsqrt %62 : vector<1x8xf32>
    %64 = arith.mulf %60, %63 : vector<1x8xf32>
    %c0_40 = arith.constant 0 : index
    %c0_41 = arith.constant 0 : index
    %65 = vector.load %arg3[%c0_40, %c0_41] : memref<1x8xf32, #tpu.memory_space<vmem>>, vector<1x8xf32>
    %66 = arith.mulf %55, %64 : vector<1x8xf32>
    %67 = arith.subf %65, %66 : vector<1x8xf32>
    %68 = tpu.iota {dimensions = array<i32: 1>} : vector<8x128xi32>
    %c8_i32_42 = arith.constant 8 : i32
    %c0_i32_43 = arith.constant 0 : i32
    %69 = arith.cmpi eq, %c8_i32_42, %c0_i32_43 : i32
    %c1_i32_44 = arith.constant 1 : i32
    %70 = arith.select %69, %c1_i32_44, %c8_i32_42 : i32
    %71 = vector.broadcast %70 : i32 to vector<8x128xi32>
    %72 = arith.remsi %68, %71 : vector<8x128xi32>
    %c0_i32_45 = arith.constant 0 : i32
    %73 = vector.broadcast %c0_i32_45 : i32 to vector<8x128xi32>
    %74 = arith.cmpi ne, %72, %73 : vector<8x128xi32>
    %c0_i32_46 = arith.constant 0 : i32
    %75 = vector.broadcast %c0_i32_46 : i32 to vector<8x128xi32>
    %76 = arith.cmpi slt, %72, %75 : vector<8x128xi32>
    %c0_i32_47 = arith.constant 0 : i32
    %77 = arith.cmpi slt, %70, %c0_i32_47 : i32
    %78 = vector.broadcast %77 : i1 to vector<8x128xi1>
    %79 = vector.broadcast %78 : vector<8x128xi1> to vector<8x128xi1>
    %80 = arith.xori %76, %79 : vector<8x128xi1>
    %81 = arith.andi %80, %74 : vector<8x128xi1>
    %82 = vector.broadcast %70 : i32 to vector<8x128xi32>
    %83 = arith.addi %72, %82 : vector<8x128xi32>
    %84 = arith.select %81, %83, %72 : vector<8x128xi1>, vector<8x128xi32>
    %85 = tpu.iota {dimensions = array<i32: 0>} : vector<8x128xi32>
    %86 = arith.cmpi eq, %84, %85 : vector<8x128xi32>
    %87 = arith.extui %86 : vector<8x128xi1> to vector<8x128xi32>
    %88 = arith.sitofp %87 : vector<8x128xi32> to vector<8x128xf32>
    %cst_48 = arith.constant dense<0.000000e+00> : vector<1x128xf32>
    %89 = tpu.matmul %64, %88, %cst_48 {dimension_numbers = #tpu.dot_dimension_numbers<[1], [0], [0], [1], [0, 0, 1, 1], [], []>} : vector<1x8xf32>, vector<8x128xf32>, vector<1x128xf32> -> vector<1x128xf32>
    %cst_49 = arith.constant dense<0.000000e+00> : vector<1x128xf32>
    %90 = tpu.matmul %67, %88, %cst_49 {dimension_numbers = #tpu.dot_dimension_numbers<[1], [0], [0], [1], [0, 0, 1, 1], [], []>} : vector<1x8xf32>, vector<8x128xf32>, vector<1x128xf32> -> vector<1x128xf32>
    %91 = vector.broadcast %89 : vector<1x128xf32> to vector<32x128xf32>
    %92 = arith.mulf %25, %91 : vector<32x128xf32>
    %93 = vector.broadcast %90 : vector<1x128xf32> to vector<32x128xf32>
    %94 = arith.addf %92, %93 : vector<32x128xf32>
    %cst_50 = arith.constant 0.000000e+00 : f32
    %95 = vector.broadcast %cst_50 : f32 to vector<32x128xf32>
    %96 = arith.maximumf %94, %95 : vector<32x128xf32>
    %cst_51 = arith.constant 0.000000e+00 : f32
    %97 = vector.broadcast %cst_51 : f32 to vector<2x18x256xf32>
    %c0_52 = arith.constant 0 : index
    %c0_53 = arith.constant 0 : index
    %c0_54 = arith.constant 0 : index
    %98 = vector.load %arg9[%c0_52, %c0_53, %c0_54] : memref<2x18x256xf32, #tpu.memory_space<vmem>>, vector<2x18x256xf32>
    tpu.vector_store %arg9[%c0_52, %c0_53, %c0_54], %97 {strides = array<i32>} : memref<2x18x256xf32, #tpu.memory_space<vmem>>, vector<2x18x256xf32>,
    %99 = vector.shape_cast %96 : vector<32x128xf32> to vector<2x16x128xf32>
    %c0_55 = arith.constant 0 : index
    %c1_56 = arith.constant 1 : index
    %c0_57 = arith.constant 0 : index
    %100 = vector.load %arg9[%c0_55, %c1_56, %c0_57] : memref<2x18x256xf32, #tpu.memory_space<vmem>>, vector<2x16x128xf32>
    tpu.vector_store %arg9[%c0_55, %c1_56, %c0_57], %99 {strides = array<i32>} : memref<2x18x256xf32, #tpu.memory_space<vmem>>, vector<2x16x128xf32>,
    %cst_58 = arith.constant 0.000000e+00 : f32
    %101 = vector.broadcast %cst_58 : f32 to vector<32x128xf32>
    %c0_59 = arith.constant 0 : index
    %c0_60 = arith.constant 0 : index
    %c0_61 = arith.constant 0 : index
    %102 = vector.load %arg9[%c0_59, %c0_60, %c0_61] : memref<2x18x256xf32, #tpu.memory_space<vmem>>, vector<2x16x256xf32>
    %103 = vector.shape_cast %102 : vector<2x16x256xf32> to vector<32x256xf32>
    %104 = arith.truncf %103 : vector<32x256xf32> to vector<32x256xbf16>
    %c0_62 = arith.constant 0 : index
    %c0_63 = arith.constant 0 : index
    %c0_64 = arith.constant 0 : index
    %105 = vector.load %arg4[%c0_62, %c0_63, %c0_64] : memref<3x256x128xbf16, #tpu.memory_space<vmem>>, vector<1x256x128xbf16>
    %106 = vector.shape_cast %105 : vector<1x256x128xbf16> to vector<256x128xbf16>
    %cst_65 = arith.constant dense<0.000000e+00> : vector<32x128xf32>
    %107 = tpu.matmul %104, %106, %cst_65 {dimension_numbers = #tpu.dot_dimension_numbers<[1], [0], [0], [1], [0, 0, 1, 1], [], []>} : vector<32x256xbf16>, vector<256x128xbf16>, vector<32x128xf32> -> vector<32x128xf32>
    %108 = arith.addf %101, %107 : vector<32x128xf32>
    %c0_66 = arith.constant 0 : index
    %c1_67 = arith.constant 1 : index
    %c0_68 = arith.constant 0 : index
    %109 = vector.load %arg9[%c0_66, %c1_67, %c0_68] : memref<2x18x256xf32, #tpu.memory_space<vmem>>, vector<2x16x256xf32>
    %110 = vector.shape_cast %109 : vector<2x16x256xf32> to vector<32x256xf32>
    %111 = arith.truncf %110 : vector<32x256xf32> to vector<32x256xbf16>
    %c1_69 = arith.constant 1 : index
    %c0_70 = arith.constant 0 : index
    %c0_71 = arith.constant 0 : index
    %112 = vector.load %arg4[%c1_69, %c0_70, %c0_71] : memref<3x256x128xbf16, #tpu.memory_space<vmem>>, vector<1x256x128xbf16>
    %113 = vector.shape_cast %112 : vector<1x256x128xbf16> to vector<256x128xbf16>
    %cst_72 = arith.constant dense<0.000000e+00> : vector<32x128xf32>
    %114 = tpu.matmul %111, %113, %cst_72 {dimension_numbers = #tpu.dot_dimension_numbers<[1], [0], [0], [1], [0, 0, 1, 1], [], []>} : vector<32x256xbf16>, vector<256x128xbf16>, vector<32x128xf32> -> vector<32x128xf32>
    %115 = arith.addf %108, %114 : vector<32x128xf32>
    %c0_73 = arith.constant 0 : index
    %c2_74 = arith.constant 2 : index
    %c0_75 = arith.constant 0 : index
    %116 = vector.load %arg9[%c0_73, %c2_74, %c0_75] : memref<2x18x256xf32, #tpu.memory_space<vmem>>, vector<2x16x256xf32>
    %117 = vector.shape_cast %116 : vector<2x16x256xf32> to vector<32x256xf32>
    %118 = arith.truncf %117 : vector<32x256xf32> to vector<32x256xbf16>
    %c2_76 = arith.constant 2 : index
    %c0_77 = arith.constant 0 : index
    %c0_78 = arith.constant 0 : index
    %119 = vector.load %arg4[%c2_76, %c0_77, %c0_78] : memref<3x256x128xbf16, #tpu.memory_space<vmem>>, vector<1x256x128xbf16>
    %120 = vector.shape_cast %119 : vector<1x256x128xbf16> to vector<256x128xbf16>
    %cst_79 = arith.constant dense<0.000000e+00> : vector<32x128xf32>
    %121 = tpu.matmul %118, %120, %cst_79 {dimension_numbers = #tpu.dot_dimension_numbers<[1], [0], [0], [1], [0, 0, 1, 1], [], []>} : vector<32x256xbf16>, vector<256x128xbf16>, vector<32x128xf32> -> vector<32x128xf32>
    %122 = arith.addf %115, %121 : vector<32x128xf32>
    %cst_80 = arith.constant dense<0.000000e+00> : vector<128xf32>
    %123 = vector.multi_reduction <add>, %122, %cst_80 [0] : vector<32x128xf32> to vector<128xf32>
    %124 = vector.shape_cast %123 : vector<128xf32> to vector<1x128xf32>
    %125 = arith.mulf %122, %122 : vector<32x128xf32>
    %cst_81 = arith.constant dense<0.000000e+00> : vector<128xf32>
    %126 = vector.multi_reduction <add>, %125, %cst_81 [0] : vector<32x128xf32> to vector<128xf32>
    %127 = vector.shape_cast %126 : vector<128xf32> to vector<1x128xf32>
    %128 = tpu.iota {dimensions = array<i32: 0>} : vector<128x8xi32>
    %c8_i32_82 = arith.constant 8 : i32
    %c0_i32_83 = arith.constant 0 : i32
    %129 = arith.cmpi eq, %c8_i32_82, %c0_i32_83 : i32
    %c1_i32_84 = arith.constant 1 : i32
    %130 = arith.select %129, %c1_i32_84, %c8_i32_82 : i32
    %131 = vector.broadcast %130 : i32 to vector<128x8xi32>
    %132 = arith.remsi %128, %131 : vector<128x8xi32>
    %c0_i32_85 = arith.constant 0 : i32
    %133 = vector.broadcast %c0_i32_85 : i32 to vector<128x8xi32>
    %134 = arith.cmpi ne, %132, %133 : vector<128x8xi32>
    %c0_i32_86 = arith.constant 0 : i32
    %135 = vector.broadcast %c0_i32_86 : i32 to vector<128x8xi32>
    %136 = arith.cmpi slt, %132, %135 : vector<128x8xi32>
    %c0_i32_87 = arith.constant 0 : i32
    %137 = arith.cmpi slt, %130, %c0_i32_87 : i32
    %138 = vector.broadcast %137 : i1 to vector<128x8xi1>
    %139 = vector.broadcast %138 : vector<128x8xi1> to vector<128x8xi1>
    %140 = arith.xori %136, %139 : vector<128x8xi1>
    %141 = arith.andi %140, %134 : vector<128x8xi1>
    %142 = vector.broadcast %130 : i32 to vector<128x8xi32>
    %143 = arith.addi %132, %142 : vector<128x8xi32>
    %144 = arith.select %141, %143, %132 : vector<128x8xi1>, vector<128x8xi32>
    %145 = tpu.iota {dimensions = array<i32: 1>} : vector<128x8xi32>
    %146 = arith.cmpi eq, %144, %145 : vector<128x8xi32>
    %147 = arith.extui %146 : vector<128x8xi1> to vector<128x8xi32>
    %148 = arith.sitofp %147 : vector<128x8xi32> to vector<128x8xf32>
    %cst_88 = arith.constant dense<0.000000e+00> : vector<1x8xf32>
    %149 = tpu.matmul %124, %148, %cst_88 {dimension_numbers = #tpu.dot_dimension_numbers<[1], [0], [0], [1], [0, 0, 1, 1], [], []>} : vector<1x128xf32>, vector<128x8xf32>, vector<1x8xf32> -> vector<1x8xf32>
    %cst_89 = arith.constant dense<0.000000e+00> : vector<1x8xf32>
    %150 = tpu.matmul %127, %148, %cst_89 {dimension_numbers = #tpu.dot_dimension_numbers<[1], [0], [0], [1], [0, 0, 1, 1], [], []>} : vector<1x128xf32>, vector<128x8xf32>, vector<1x8xf32> -> vector<1x8xf32>
    %cst_90 = arith.constant 0.001953125 : f32
    %151 = vector.broadcast %cst_90 : f32 to vector<1x8xf32>
    %152 = arith.mulf %149, %151 : vector<1x8xf32>
    %cst_91 = arith.constant 0.001953125 : f32
    %153 = vector.broadcast %cst_91 : f32 to vector<1x8xf32>
    %154 = arith.mulf %150, %153 : vector<1x8xf32>
    %155 = arith.mulf %152, %152 : vector<1x8xf32>
    %156 = arith.subf %154, %155 : vector<1x8xf32>
    %c0_92 = arith.constant 0 : index
    %c0_93 = arith.constant 0 : index
    %157 = vector.load %arg5[%c0_92, %c0_93] : memref<1x8xf32, #tpu.memory_space<vmem>>, vector<1x8xf32>
    %cst_94 = arith.constant 9.99999974E-6 : f32
    %158 = vector.broadcast %cst_94 : f32 to vector<1x8xf32>
    %159 = arith.addf %156, %158 : vector<1x8xf32>
    %160 = math.rsqrt %159 : vector<1x8xf32>
    %161 = arith.mulf %157, %160 : vector<1x8xf32>
    %c0_95 = arith.constant 0 : index
    %c0_96 = arith.constant 0 : index
    %162 = vector.load %arg6[%c0_95, %c0_96] : memref<1x8xf32, #tpu.memory_space<vmem>>, vector<1x8xf32>
    %163 = arith.mulf %152, %161 : vector<1x8xf32>
    %164 = arith.subf %162, %163 : vector<1x8xf32>
    %165 = tpu.iota {dimensions = array<i32: 1>} : vector<8x128xi32>
    %c8_i32_97 = arith.constant 8 : i32
    %c0_i32_98 = arith.constant 0 : i32
    %166 = arith.cmpi eq, %c8_i32_97, %c0_i32_98 : i32
    %c1_i32_99 = arith.constant 1 : i32
    %167 = arith.select %166, %c1_i32_99, %c8_i32_97 : i32
    %168 = vector.broadcast %167 : i32 to vector<8x128xi32>
    %169 = arith.remsi %165, %168 : vector<8x128xi32>
    %c0_i32_100 = arith.constant 0 : i32
    %170 = vector.broadcast %c0_i32_100 : i32 to vector<8x128xi32>
    %171 = arith.cmpi ne, %169, %170 : vector<8x128xi32>
    %c0_i32_101 = arith.constant 0 : i32
    %172 = vector.broadcast %c0_i32_101 : i32 to vector<8x128xi32>
    %173 = arith.cmpi slt, %169, %172 : vector<8x128xi32>
    %c0_i32_102 = arith.constant 0 : i32
    %174 = arith.cmpi slt, %167, %c0_i32_102 : i32
    %175 = vector.broadcast %174 : i1 to vector<8x128xi1>
    %176 = vector.broadcast %175 : vector<8x128xi1> to vector<8x128xi1>
    %177 = arith.xori %173, %176 : vector<8x128xi1>
    %178 = arith.andi %177, %171 : vector<8x128xi1>
    %179 = vector.broadcast %167 : i32 to vector<8x128xi32>
    %180 = arith.addi %169, %179 : vector<8x128xi32>
    %181 = arith.select %178, %180, %169 : vector<8x128xi1>, vector<8x128xi32>
    %182 = tpu.iota {dimensions = array<i32: 0>} : vector<8x128xi32>
    %183 = arith.cmpi eq, %181, %182 : vector<8x128xi32>
    %184 = arith.extui %183 : vector<8x128xi1> to vector<8x128xi32>
    %185 = arith.sitofp %184 : vector<8x128xi32> to vector<8x128xf32>
    %cst_103 = arith.constant dense<0.000000e+00> : vector<1x128xf32>
    %186 = tpu.matmul %161, %185, %cst_103 {dimension_numbers = #tpu.dot_dimension_numbers<[1], [0], [0], [1], [0, 0, 1, 1], [], []>} : vector<1x8xf32>, vector<8x128xf32>, vector<1x128xf32> -> vector<1x128xf32>
    %cst_104 = arith.constant dense<0.000000e+00> : vector<1x128xf32>
    %187 = tpu.matmul %164, %185, %cst_104 {dimension_numbers = #tpu.dot_dimension_numbers<[1], [0], [0], [1], [0, 0, 1, 1], [], []>} : vector<1x8xf32>, vector<8x128xf32>, vector<1x128xf32> -> vector<1x128xf32>
    %188 = vector.broadcast %186 : vector<1x128xf32> to vector<32x128xf32>
    %189 = arith.mulf %122, %188 : vector<32x128xf32>
    %190 = vector.broadcast %187 : vector<1x128xf32> to vector<32x128xf32>
    %191 = arith.addf %189, %190 : vector<32x128xf32>
    %cst_105 = arith.constant 0.000000e+00 : f32
    %192 = vector.broadcast %cst_105 : f32 to vector<32x128xf32>
    %193 = arith.maximumf %191, %192 : vector<32x128xf32>
    %c0_106 = arith.constant 0 : index
    %c0_107 = arith.constant 0 : index
    %194 = vector.load %arg7[%c0_106, %c0_107] : memref<32x128xf32, #tpu.memory_space<vmem>>, vector<32x128xf32>
    tpu.vector_store %arg7[%c0_106, %c0_107], %193 {strides = array<i32>} : memref<32x128xf32, #tpu.memory_space<vmem>>, vector<32x128xf32>,
    return
  }
}

</mosaic_0001>

<llo_original>
// kernel: tpu_custom_call.1
$region0: #{tpu_custom_call.1}
  #allocation0 [shape = 'u32[]', space=smem, size = 0x4, offset = 0x4, fixed_abs, tag = 'smem constant byte address 0x4 - core index']
  #allocation1 [shape = 'u32[144,128]{1,0:T(1,128)}', space=vmem, size = 0x12000, scoped, tag = 'internal scratch']
  #allocation2 [shape = 'f32[2,18,128]{2,1,0:T(8,128)}', space=vmem, size = 0x6000, scoped, tag = 'scratch operand']
  #allocation3 [shape = 'f32[2,18,256]{2,1,0:T(8,128)}', space=vmem, size = 0xc000, scoped, tag = 'scratch operand']
  %s0 = inlined_call_operand.hbm [shape: f32[2,16,64], index: 0, kind: input, shape index: {}]
  %s1 = inlined_call_operand.hbm [shape: bf16[3,128,128], index: 1, kind: input, shape index: {}]
  %s2 = inlined_call_operand.vmem [shape: f32[1,8], index: 2, kind: input, shape index: {}]
  %s3 = inlined_call_operand.vmem [shape: f32[1,8], index: 3, kind: input, shape index: {}]
  %s4 = inlined_call_operand.hbm [shape: bf16[3,256,128], index: 4, kind: input, shape index: {}]
  %s5 = inlined_call_operand.vmem [shape: f32[1,8], index: 5, kind: input, shape index: {}]
  %s6 = inlined_call_operand.vmem [shape: f32[1,8], index: 6, kind: input, shape index: {}]
  %s7 = inlined_call_operand.hbm [shape: f32[32,128], index: 7, kind: output, shape index: {}]
  %s8 = sld [smem:[#allocation0]]
  $region50: #{tpu_custom_call.1} parent=0
    _
  %s10 = ssub.s32 1, %s8
  %s11 = scalar_select 0, %s10, %s8
  $region1: #{tpu_custom_call.1} parent=0
    #allocation4 [shape = 'u8[16384]{0}', space=vmem, size = 0x4000, scoped, tag = 'input window, operand 0, single buffered']
    #allocation5 [shape = 's32[1]{0}', space=sflag, size = 0x4, scoped, tag = 'scoped memory for tpu_custom_call.1']
    #allocation6 [shape = 's32[1]{0}', space=sflag, size = 0x4, scoped, tag = 'scoped memory for tpu_custom_call.1']
    #allocation7 [shape = 'u8[98304]{0}', space=vmem, size = 0x18000, scoped, tag = 'input window, operand 1, single buffered']
    #allocation8 [shape = 's32[1]{0}', space=sflag, size = 0x4, scoped, tag = 'scoped memory for tpu_custom_call.1']
    #allocation9 [shape = 'u8[196608]{0}', space=vmem, size = 0x30000, scoped, tag = 'input window, operand 4, single buffered']
    #allocation10 [shape = 'u8[16384]{0}', space=vmem, size = 0x4000, scoped, tag = 'output window, operand 0, single buffered']
    %12 = vsyncpa [#allocation5], 0
    %13 = vsyncpa [#allocation8], 0
    %14 = vsyncpa [#allocation6], 0
    // Predicated region
    $region2: #{tpu_custom_call.1} parent=1 // pred_check
      _
    $region3: #{tpu_custom_call.1} parent=1 // pred_check_branch
      %16 = sbr.rel (0) target = $region5
    $region4: #{tpu_custom_call.1} parent=1 // pred_region
      %s18 = ssub.s32 512, 512
      %19 = vsyncadd [#allocation5], %s18
      %s20 = sshll.u32 [#allocation4], 4
      %s21 = int_to_ptr.vmem [resolvable:$true] %s20
      %26 = dma.hbm_to_vmem [thread:$0]  %s0, 512, %s21, [#allocation5], 128, 128, 8
    $region5: #{tpu_custom_call.1} parent=1 // pred_fallthru
      _
    // Predicated region
    $region6: #{tpu_custom_call.1} parent=1 // pred_check
      _
    $region7: #{tpu_custom_call.1} parent=1 // pred_check_branch
      %28 = sbr.rel (0) target = $region9
    $region8: #{tpu_custom_call.1} parent=1 // pred_region
      %s30 = ssub.s32 3072, 3072
      %31 = vsyncadd [#allocation8], %s30
      %s32 = sshll.u32 [#allocation7], 4
      %s33 = int_to_ptr.vmem [resolvable:$true] %s32
      %38 = dma.hbm_to_vmem [thread:$0]  %s1, 3072, %s33, [#allocation8], 64, 64, 4
    $region9: #{tpu_custom_call.1} parent=1 // pred_fallthru
      _
    // Predicated region
    $region10: #{tpu_custom_call.1} parent=1 // pred_check
      _
    $region11: #{tpu_custom_call.1} parent=1 // pred_check_branch
      %40 = sbr.rel (0) target = $region13
    $region12: #{tpu_custom_call.1} parent=1 // pred_region
      _
    $region13: #{tpu_custom_call.1} parent=1 // pred_fallthru
      _
    // Predicated region
    $region14: #{tpu_custom_call.1} parent=1 // pred_check
      _
    $region15: #{tpu_custom_call.1} parent=1 // pred_check_branch
      %42 = sbr.rel (0) target = $region17
    $region16: #{tpu_custom_call.1} parent=1 // pred_region
      _
    $region17: #{tpu_custom_call.1} parent=1 // pred_fallthru
      _
    // Predicated region
    $region18: #{tpu_custom_call.1} parent=1 // pred_check
      _
    $region19: #{tpu_custom_call.1} parent=1 // pred_check_branch
      %44 = sbr.rel (0) target = $region21
    $region20: #{tpu_custom_call.1} parent=1 // pred_region
      %s46 = ssub.s32 6144, 6144
      %47 = vsyncadd [#allocation8], %s46
      %s48 = sshll.u32 [#allocation9], 4
      %s49 = int_to_ptr.vmem [resolvable:$true] %s48
      %54 = dma.hbm_to_vmem [thread:$0]  %s4, 6144, %s49, [#allocation8], 64, 64, 4
    $region21: #{tpu_custom_call.1} parent=1 // pred_fallthru
      _
    // Predicated region
    $region22: #{tpu_custom_call.1} parent=1 // pred_check
      _
    $region23: #{tpu_custom_call.1} parent=1 // pred_check_branch
      %56 = sbr.rel (0) target = $region25
    $region24: #{tpu_custom_call.1} parent=1 // pred_region
      _
    $region25: #{tpu_custom_call.1} parent=1 // pred_fallthru
      _
    // Predicated region
    $region26: #{tpu_custom_call.1} parent=1 // pred_check
      _
    $region27: #{tpu_custom_call.1} parent=1 // pred_check_branch
      %58 = sbr.rel (0) target = $region29
    $region28: #{tpu_custom_call.1} parent=1 // pred_region
      _
    $region29: #{tpu_custom_call.1} parent=1 // pred_fallthru
      _
    // Predicated region
    $region30: #{tpu_custom_call.1} parent=1 // pred_check
      _
    $region31: #{tpu_custom_call.1} parent=1 // pred_check_branch
      %60 = sbr.rel (0) target = $region33
    $region32: #{tpu_custom_call.1} parent=1 // pred_region
      %61 = dma.done [#allocation5], 512
    $region33: #{tpu_custom_call.1} parent=1 // pred_fallthru
      _
    // Predicated region
    $region34: #{tpu_custom_call.1} parent=1 // pred_check
      _
    $region35: #{tpu_custom_call.1} parent=1 // pred_check_branch
      %63 = sbr.rel (0) target = $region37
    $region36: #{tpu_custom_call.1} parent=1 // pred_region
      %64 = dma.done [#allocation8], 3072
    $region37: #{tpu_custom_call.1} parent=1 // pred_fallthru
      _
    // Predicated region
    $region38: #{tpu_custom_call.1} parent=1 // pred_check
      _
    $region39: #{tpu_custom_call.1} parent=1 // pred_check_branch
      %66 = sbr.rel (0) target = $region41
    $region40: #{tpu_custom_call.1} parent=1 // pred_region
      %67 = dma.done [#allocation8], 6144
    $region41: #{tpu_custom_call.1} parent=1 // pred_fallthru
      _
    %69 = vst [vmem:[#allocation2] sm:$0xff] 0.0
    %70 = vst [vmem:[#allocation2 + $0x8] sm:$0xff] 0.0
    %71 = vst [vmem:[#allocation2 + $0x10] sm:$0x3] 0.0
    %72 = vst [vmem:[#allocation2 + $0x18] sm:$0xff] 0.0
    %73 = vst [vmem:[#allocation2 + $0x20] sm:$0xff] 0.0
    %74 = vst [vmem:[#allocation2 + $0x28] sm:$0x3] 0.0
    %v75 = vld [vmem:[#allocation4] sm:$0xff]
    %v76 = vld [vmem:[#allocation4 + $0x8] sm:$0xff]
    %v77 = vld [vmem:[#allocation4 + $0x10] sm:$0xff]
    %v78 = vld [vmem:[#allocation4 + $0x18] sm:$0xff]
    %vm79 = vcmask 523264
    %80 = vst.msk [vmem:[#allocation2 + $0x1] sm:$0xff] %vm79, %v75
    %81 = vst.msk [vmem:[#allocation2 + $0x9] sm:$0xff] %vm79, %v76
    %82 = vst.msk [vmem:[#allocation2 + $0x19] sm:$0xff] %vm79, %v77
    %83 = vst.msk [vmem:[#allocation2 + $0x21] sm:$0xff] %vm79, %v78
    %v84 = vld [vmem:[#allocation2] sm:$0xff]
    %v85 = vld [vmem:[#allocation2 + $0x8] sm:$0xff]
    %v86 = vld [vmem:[#allocation2 + $0x18] sm:$0xff]
    %v87 = vld [vmem:[#allocation2 + $0x20] sm:$0xff]
    %v88 = vpack.c.bf16 %v85, %v84
    %v89 = vpack.c.bf16 %v87, %v86
    %v90 = vld [vmem:[#allocation7] sm:$0xf]
    %v91 = vld [vmem:[#allocation7 + $0x4] sm:$0xf]
    %v92 = vld [vmem:[#allocation7 + $0x8] sm:$0xf]
    %v93 = vld [vmem:[#allocation7 + $0xc] sm:$0xf]
    %v94 = vld [vmem:[#allocation7 + $0x10] sm:$0xf]
    %v95 = vld [vmem:[#allocation7 + $0x14] sm:$0xf]
    %v96 = vld [vmem:[#allocation7 + $0x18] sm:$0xf]
    %v97 = vld [vmem:[#allocation7 + $0x1c] sm:$0xf]
    %v98 = vld [vmem:[#allocation7 + $0x20] sm:$0xf]
    %v99 = vld [vmem:[#allocation7 + $0x24] sm:$0xf]
    %v100 = vld [vmem:[#allocation7 + $0x28] sm:$0xf]
    %v101 = vld [vmem:[#allocation7 + $0x2c] sm:$0xf]
    %v102 = vld [vmem:[#allocation7 + $0x30] sm:$0xf]
    %v103 = vld [vmem:[#allocation7 + $0x34] sm:$0xf]
    %v104 = vld [vmem:[#allocation7 + $0x38] sm:$0xf]
    %v105 = vld [vmem:[#allocation7 + $0x3c] sm:$0xf]
    %v106 = vld [vmem:[#allocation2 + $0x1] sm:$0xff]
    %v107 = vld [vmem:[#allocation2 + $0x9] sm:$0xff]
    %v108 = vld [vmem:[#allocation2 + $0x19] sm:$0xff]
    %v109 = vld [vmem:[#allocation2 + $0x21] sm:$0xff]
    %v110 = vpack.c.bf16 %v107, %v106
    %v111 = vpack.c.bf16 %v109, %v108
    %s112 = scalar_lea.vmem [#allocation7], 64
    %v113 = vld [vmem:[%s112] sm:$0xf]
    %v114 = vld [vmem:[%s112 + $0x4] sm:$0xf]
    %v115 = vld [vmem:[%s112 + $0x8] sm:$0xf]
    %v116 = vld [vmem:[%s112 + $0xc] sm:$0xf]
    %v117 = vld [vmem:[%s112 + $0x10] sm:$0xf]
    %v118 = vld [vmem:[%s112 + $0x14] sm:$0xf]
    %v119 = vld [vmem:[%s112 + $0x18] sm:$0xf]
    %v120 = vld [vmem:[%s112 + $0x1c] sm:$0xf]
    %v121 = vld [vmem:[%s112 + $0x20] sm:$0xf]
    %v122 = vld [vmem:[%s112 + $0x24] sm:$0xf]
    %v123 = vld [vmem:[%s112 + $0x28] sm:$0xf]
    %v124 = vld [vmem:[%s112 + $0x2c] sm:$0xf]
    %v125 = vld [vmem:[%s112 + $0x30] sm:$0xf]
    %v126 = vld [vmem:[%s112 + $0x34] sm:$0xf]
    %v127 = vld [vmem:[%s112 + $0x38] sm:$0xf]
    %v128 = vld [vmem:[%s112 + $0x3c] sm:$0xf]
    %v145 = vunpack.c.l.b16 %v113
    %v146 = vunpack.c.l.b16 %v114
    %v147 = vunpack.c.l.b16 %v115
    %v148 = vunpack.c.l.b16 %v116
    %v149 = vunpack.c.l.b16 %v117
    %v150 = vunpack.c.l.b16 %v118
    %v151 = vunpack.c.l.b16 %v119
    %v152 = vunpack.c.l.b16 %v120
    %v153 = vunpack.c.l.b16 %v121
    %v154 = vunpack.c.l.b16 %v122
    %v155 = vunpack.c.l.b16 %v123
    %v156 = vunpack.c.l.b16 %v124
    %v157 = vunpack.c.l.b16 %v125
    %v158 = vunpack.c.l.b16 %v126
    %v159 = vunpack.c.l.b16 %v127
    %v160 = vunpack.c.l.b16 %v128
    %v161 = vpack.c.b16 %v146, %v145
    %v162 = vpack.c.b16 %v148, %v147
    %v163 = vpack.c.b16 %v150, %v149
    %v164 = vpack.c.b16 %v152, %v151
    %v165 = vpack.c.b16 %v154, %v153
    %v166 = vpack.c.b16 %v156, %v155
    %v167 = vpack.c.b16 %v158, %v157
    %v168 = vpack.c.b16 %v160, %v159
    %177 = vmatprep.subr.bf16.mxu0 0
    %178 = vmatpush1.bf16.msra.mxu0 %v161
    %179 = vmatprep.subr.bf16.mxu0 0
    %180 = vmatpush1.bf16.msra.mxu0 %v162
    %181 = vmatprep.subr.bf16.mxu0 0
    %182 = vmatpush1.bf16.msra.mxu0 %v163
    %183 = vmatprep.subr.bf16.mxu0 0
    %184 = vmatpush1.bf16.msra.mxu0 %v164
    %185 = vmatprep.subr.bf16.mxu0 0
    %186 = vmatpush1.bf16.msra.mxu0 %v165
    %187 = vmatprep.subr.bf16.mxu0 0
    %188 = vmatpush1.bf16.msra.mxu0 %v166
    %189 = vmatprep.subr.bf16.mxu0 0
    %190 = vmatpush1.bf16.msra.mxu0 %v167
    %191 = vmatprep.subr.bf16.mxu0 0
    %192 = vmatpush1.bf16.msra.mxu0 %v168
    %193 = vmatprep.subr.bf16.mxu0 0
    %194 = vmatpush1.bf16.msra.mxu0 0
    %195 = vmatprep.subr.bf16.mxu0 0
    %196 = vmatpush1.bf16.msra.mxu0 0
    %197 = vmatprep.subr.bf16.mxu0 0
    %198 = vmatpush1.bf16.msra.mxu0 0
    %199 = vmatprep.subr.bf16.mxu0 0
    %200 = vmatpush1.bf16.msra.mxu0 0
    %201 = vmatprep.subr.bf16.mxu0 0
    %202 = vmatpush1.bf16.msra.mxu0 0
    %203 = vmatprep.subr.bf16.mxu0 0
    %204 = vmatpush1.bf16.msra.mxu0 0
    %205 = vmatprep.subr.bf16.mxu0 0
    %206 = vmatpush1.bf16.msra.mxu0 0
    %207 = vmatprep.subr.bf16.mxu0 0
    %208 = vmatpush1.bf16.msra.mxu0 0
    %209 = vmatprep.mubr.bf16.mxu0 0
    %210 = vmatmul.mubr.bf16.gmra.mrb[0].mxu0 %v110
    %v211 = vpop.f32.mrb[0].mxu0
    %v212 = vadd.f32 0.0, %v211
    %v213 = vpop.f32.mrb[0].mxu0
    %v214 = vpop.f32.mrb[0].mxu0
    %v215 = vadd.f32 0.0, %v214
    %v216 = vpop.f32.mrb[0].mxu0
    %217 = vmatprep.mubr.bf16.mxu0 0
    %218 = vmatmul.mubr.bf16.gmra.mrb[0].mxu0 %v111
    %v219 = vpop.f32.mrb[0].mxu0
    %v220 = vadd.f32 0.0, %v219
    %v221 = vpop.f32.mrb[0].mxu0
    %v222 = vpop.f32.mrb[0].mxu0
    %v223 = vadd.f32 0.0, %v222
    %v224 = vpop.f32.mrb[0].mxu0
    %225 = vdwg.mxu0
    %v242 = vunpack.c.l.b16 %v90
    %v243 = vunpack.c.l.b16 %v91
    %v244 = vunpack.c.l.b16 %v92
    %v245 = vunpack.c.l.b16 %v93
    %v246 = vunpack.c.l.b16 %v94
    %v247 = vunpack.c.l.b16 %v95
    %v248 = vunpack.c.l.b16 %v96
    %v249 = vunpack.c.l.b16 %v97
    %v250 = vunpack.c.l.b16 %v98
    %v251 = vunpack.c.l.b16 %v99
    %v252 = vunpack.c.l.b16 %v100
    %v253 = vunpack.c.l.b16 %v101
    %v254 = vunpack.c.l.b16 %v102
    %v255 = vunpack.c.l.b16 %v103
    %v256 = vunpack.c.l.b16 %v104
    %v257 = vunpack.c.l.b16 %v105
    %v258 = vpack.c.b16 %v243, %v242
    %v259 = vpack.c.b16 %v245, %v244
    %v260 = vpack.c.b16 %v247, %v246
    %v261 = vpack.c.b16 %v249, %v248
    %v262 = vpack.c.b16 %v251, %v250
    %v263 = vpack.c.b16 %v253, %v252
    %v264 = vpack.c.b16 %v255, %v254
    %v265 = vpack.c.b16 %v257, %v256
    %274 = vmatprep.subr.bf16.mxu0 0
    %275 = vmatpush1.bf16.msra.mxu0 %v258
    %276 = vmatprep.subr.bf16.mxu0 0
    %277 = vmatpush1.bf16.msra.mxu0 %v259
    %278 = vmatprep.subr.bf16.mxu0 0
    %279 = vmatpush1.bf16.msra.mxu0 %v260
    %280 = vmatprep.subr.bf16.mxu0 0
    %281 = vmatpush1.bf16.msra.mxu0 %v261
    %282 = vmatprep.subr.bf16.mxu0 0
    %283 = vmatpush1.bf16.msra.mxu0 %v262
    %284 = vmatprep.subr.bf16.mxu0 0
    %285 = vmatpush1.bf16.msra.mxu0 %v263
    %286 = vmatprep.subr.bf16.mxu0 0
    %287 = vmatpush1.bf16.msra.mxu0 %v264
    %288 = vmatprep.subr.bf16.mxu0 0
    %289 = vmatpush1.bf16.msra.mxu0 %v265
    %290 = vmatprep.subr.bf16.mxu0 0
    %291 = vmatpush1.bf16.msra.mxu0 0
    %292 = vmatprep.subr.bf16.mxu0 0
    %293 = vmatpush1.bf16.msra.mxu0 0
    %294 = vmatprep.subr.bf16.mxu0 0
    %295 = vmatpush1.bf16.msra.mxu0 0
    %296 = vmatprep.subr.bf16.mxu0 0
    %297 = vmatpush1.bf16.msra.mxu0 0
    %298 = vmatprep.subr.bf16.mxu0 0
    %299 = vmatpush1.bf16.msra.mxu0 0
    %300 = vmatprep.subr.bf16.mxu0 0
    %301 = vmatpush1.bf16.msra.mxu0 0
    %302 = vmatprep.subr.bf16.mxu0 0
    %303 = vmatpush1.bf16.msra.mxu0 0
    %304 = vmatprep.subr.bf16.mxu0 0
    %305 = vmatpush1.bf16.msra.mxu0 0
    %306 = vmatprep.mubr.bf16.mxu0 0
    %307 = vmatmul.mubr.bf16.gmra.mrb[0].mxu0 %v88
    %v308 = vpop.f32.mrb[0].mxu0
    %v309 = vadd.f32 %v212, %v308
    %v310 = vpop.f32.mrb[0].mxu0
    %v311 = vpop.f32.mrb[0].mxu0
    %v312 = vadd.f32 %v215, %v311
    %v313 = vpop.f32.mrb[0].mxu0
    %314 = vmatprep.mubr.bf16.mxu0 0
    %315 = vmatmul.mubr.bf16.gmra.mrb[0].mxu0 %v89
    %v316 = vpop.f32.mrb[0].mxu0
    %v317 = vadd.f32 %v220, %v316
    %v318 = vpop.f32.mrb[0].mxu0
    %v319 = vpop.f32.mrb[0].mxu0
    %v320 = vadd.f32 %v223, %v319
    %v321 = vpop.f32.mrb[0].mxu0
    %322 = vdwg.mxu0
    %v323 = vld [vmem:[#allocation2 + $0x2] sm:$0xff]
    %v324 = vld [vmem:[#allocation2 + $0xa] sm:$0xff]
    %v325 = vld [vmem:[#allocation2 + $0x1a] sm:$0xff]
    %v326 = vld [vmem:[#allocation2 + $0x22] sm:$0xff]
    %v327 = vpack.c.bf16 %v324, %v323
    %v328 = vpack.c.bf16 %v326, %v325
    %s329 = scalar_lea.vmem [#allocation7], 128
    %v330 = vld [vmem:[%s329] sm:$0xf]
    %v331 = vld [vmem:[%s329 + $0x4] sm:$0xf]
    %v332 = vld [vmem:[%s329 + $0x8] sm:$0xf]
    %v333 = vld [vmem:[%s329 + $0xc] sm:$0xf]
    %v334 = vld [vmem:[%s329 + $0x10] sm:$0xf]
    %v335 = vld [vmem:[%s329 + $0x14] sm:$0xf]
    %v336 = vld [vmem:[%s329 + $0x18] sm:$0xf]
    %v337 = vld [vmem:[%s329 + $0x1c] sm:$0xf]
    %v338 = vld [vmem:[%s329 + $0x20] sm:$0xf]
    %v339 = vld [vmem:[%s329 + $0x24] sm:$0xf]
    %v340 = vld [vmem:[%s329 + $0x28] sm:$0xf]
    %v341 = vld [vmem:[%s329 + $0x2c] sm:$0xf]
    %v342 = vld [vmem:[%s329 + $0x30] sm:$0xf]
    %v343 = vld [vmem:[%s329 + $0x34] sm:$0xf]
    %v344 = vld [vmem:[%s329 + $0x38] sm:$0xf]
    %v345 = vld [vmem:[%s329 + $0x3c] sm:$0xf]
    %v362 = vunpack.c.l.b16 %v330
    %v363 = vunpack.c.l.b16 %v331
    %v364 = vunpack.c.l.b16 %v332
    %v365 = vunpack.c.l.b16 %v333
    %v366 = vunpack.c.l.b16 %v334
    %v367 = vunpack.c.l.b16 %v335
    %v368 = vunpack.c.l.b16 %v336
    %v369 = vunpack.c.l.b16 %v337
    %v370 = vunpack.c.l.b16 %v338
    %v371 = vunpack.c.l.b16 %v339
    %v372 = vunpack.c.l.b16 %v340
    %v373 = vunpack.c.l.b16 %v341
    %v374 = vunpack.c.l.b16 %v342
    %v375 = vunpack.c.l.b16 %v343
    %v376 = vunpack.c.l.b16 %v344
    %v377 = vunpack.c.l.b16 %v345
    %v378 = vpack.c.b16 %v363, %v362
    %v379 = vpack.c.b16 %v365, %v364
    %v380 = vpack.c.b16 %v367, %v366
    %v381 = vpack.c.b16 %v369, %v368
    %v382 = vpack.c.b16 %v371, %v370
    %v383 = vpack.c.b16 %v373, %v372
    %v384 = vpack.c.b16 %v375, %v374
    %v385 = vpack.c.b16 %v377, %v376
    %394 = vmatprep.subr.bf16.mxu0 0
    %395 = vmatpush1.bf16.msra.mxu0 %v378
    %396 = vmatprep.subr.bf16.mxu0 0
    %397 = vmatpush1.bf16.msra.mxu0 %v379
    %398 = vmatprep.subr.bf16.mxu0 0
    %399 = vmatpush1.bf16.msra.mxu0 %v380
    %400 = vmatprep.subr.bf16.mxu0 0
    %401 = vmatpush1.bf16.msra.mxu0 %v381
    %402 = vmatprep.subr.bf16.mxu0 0
    %403 = vmatpush1.bf16.msra.mxu0 %v382
    %404 = vmatprep.subr.bf16.mxu0 0
    %405 = vmatpush1.bf16.msra.mxu0 %v383
    %406 = vmatprep.subr.bf16.mxu0 0
    %407 = vmatpush1.bf16.msra.mxu0 %v384
    %408 = vmatprep.subr.bf16.mxu0 0
    %409 = vmatpush1.bf16.msra.mxu0 %v385
    %410 = vmatprep.subr.bf16.mxu0 0
    %411 = vmatpush1.bf16.msra.mxu0 0
    %412 = vmatprep.subr.bf16.mxu0 0
    %413 = vmatpush1.bf16.msra.mxu0 0
    %414 = vmatprep.subr.bf16.mxu0 0
    %415 = vmatpush1.bf16.msra.mxu0 0
    %416 = vmatprep.subr.bf16.mxu0 0
    %417 = vmatpush1.bf16.msra.mxu0 0
    %418 = vmatprep.subr.bf16.mxu0 0
    %419 = vmatpush1.bf16.msra.mxu0 0
    %420 = vmatprep.subr.bf16.mxu0 0
    %421 = vmatpush1.bf16.msra.mxu0 0
    %422 = vmatprep.subr.bf16.mxu0 0
    %423 = vmatpush1.bf16.msra.mxu0 0
    %424 = vmatprep.subr.bf16.mxu0 0
    %425 = vmatpush1.bf16.msra.mxu0 0
    %426 = vmatprep.mubr.bf16.mxu0 0
    %427 = vmatmul.mubr.bf16.gmra.mrb[0].mxu0 %v327
    %v428 = vpop.f32.mrb[0].mxu0
    %v429 = vadd.f32 0.0, %v428
    %v430 = vpop.f32.mrb[0].mxu0
    %v431 = vpop.f32.mrb[0].mxu0
    %v432 = vadd.f32 0.0, %v431
    %v433 = vpop.f32.mrb[0].mxu0
    %434 = vmatprep.mubr.bf16.mxu0 0
    %435 = vmatmul.mubr.bf16.gmra.mrb[0].mxu0 %v328
    %v436 = vpop.f32.mrb[0].mxu0
    %v437 = vadd.f32 0.0, %v436
    %v438 = vpop.f32.mrb[0].mxu0
    %v439 = vpop.f32.mrb[0].mxu0
    %v440 = vadd.f32 0.0, %v439
    %v441 = vpop.f32.mrb[0].mxu0
    %442 = vdwg.mxu0
    %v443 = vadd.f32 %v309, %v429
    %v444 = vadd.f32 %v312, %v432
    %v445 = vadd.f32 %v317, %v437
    %v446 = vadd.f32 %v320, %v440
    %v447 = vadd.f32 %v443, %v444
    %v448 = vadd.f32 %v447, %v445
    %v449 = vadd.f32 %v448, %v446
    %v450 = vrot.slane %v449, 4
    %v451 = vadd.f32 %v449, %v450
    %v452 = vrot.slane %v451, 2
    %v453 = vadd.f32 %v451, %v452
    %v454 = vrot.slane %v453, 1
    %v455 = vadd.f32 %v453, %v454
    %v456 = vmul.f32 %v443, %v443
    %v457 = vmul.f32 %v444, %v444
    %v458 = vmul.f32 %v445, %v445
    %v459 = vmul.f32 %v446, %v446
    %v460 = vadd.f32 %v456, %v457
    %v461 = vadd.f32 %v460, %v458
    %v462 = vadd.f32 %v461, %v459
    %v463 = vrot.slane %v462, 4
    %v464 = vadd.f32 %v462, %v463
    %v465 = vrot.slane %v464, 2
    %v466 = vadd.f32 %v464, %v465
    %v467 = vrot.slane %v466, 1
    %v468 = vadd.f32 %v466, %v467
    %v469 = vlaneseq
    %v470 = vshrl.u32 %v469, 7
    %v471 = vadd.s32 %v470, 8
    %v472 = vadd.s32 %v470, 16
    %v473 = vadd.s32 %v470, 24
    %v474 = vadd.s32 %v470, 32
    %v475 = vadd.s32 %v470, 40
    %v476 = vadd.s32 %v470, 48
    %v477 = vadd.s32 %v470, 56
    %v478 = vadd.s32 %v470, 64
    %v479 = vadd.s32 %v470, 72
    %v480 = vadd.s32 %v470, 80
    %v481 = vadd.s32 %v470, 88
    %v482 = vadd.s32 %v470, 96
    %v483 = vadd.s32 %v470, 104
    %v484 = vadd.s32 %v470, 112
    %v485 = vadd.s32 %v470, 120
    %vm486 = vcmp.lt.s32.totalorder %v470, 0
    %v487 = vsub.s32 0, %v470
    %v488 = vsel %vm486, %v487, %v470
    %v489 = vshrl.u32 %v488, 3
    %v490 = vand.u32 %v488, 7
    %v491 = vsub.s32 0, %v490
    %v492 = vsel %vm486, %v491, %v490
    %vm493 = vcmp.lt.s32.totalorder %v471, 0
    %v494 = vsub.s32 0, %v471
    %v495 = vsel %vm493, %v494, %v471
    %v496 = vshrl.u32 %v495, 3
    %v497 = vand.u32 %v495, 7
    %v498 = vsub.s32 0, %v497
    %v499 = vsel %vm493, %v498, %v497
    %vm500 = vcmp.lt.s32.totalorder %v472, 0
    %v501 = vsub.s32 0, %v472
    %v502 = vsel %vm500, %v501, %v472
    %v503 = vshrl.u32 %v502, 3
    %v504 = vand.u32 %v502, 7
    %v505 = vsub.s32 0, %v504
    %v506 = vsel %vm500, %v505, %v504
    %vm507 = vcmp.lt.s32.totalorder %v473, 0
    %v508 = vsub.s32 0, %v473
    %v509 = vsel %vm507, %v508, %v473
    %v510 = vshrl.u32 %v509, 3
    %v511 = vand.u32 %v509, 7
    %v512 = vsub.s32 0, %v511
    %v513 = vsel %vm507, %v512, %v511
    %vm514 = vcmp.lt.s32.totalorder %v474, 0
    %v515 = vsub.s32 0, %v474
    %v516 = vsel %vm514, %v515, %v474
    %v517 = vshrl.u32 %v516, 3
    %v518 = vand.u32 %v516, 7
    %v519 = vsub.s32 0, %v518
    %v520 = vsel %vm514, %v519, %v518
    %vm521 = vcmp.lt.s32.totalorder %v475, 0
    %v522 = vsub.s32 0, %v475
    %v523 = vsel %vm521, %v522, %v475
    %v524 = vshrl.u32 %v523, 3
    %v525 = vand.u32 %v523, 7
    %v526 = vsub.s32 0, %v525
    %v527 = vsel %vm521, %v526, %v525
    %vm528 = vcmp.lt.s32.totalorder %v476, 0
    %v529 = vsub.s32 0, %v476
    %v530 = vsel %vm528, %v529, %v476
    %v531 = vshrl.u32 %v530, 3
    %v532 = vand.u32 %v530, 7
    %v533 = vsub.s32 0, %v532
    %v534 = vsel %vm528, %v533, %v532
    %vm535 = vcmp.lt.s32.totalorder %v477, 0
    %v536 = vsub.s32 0, %v477
    %v537 = vsel %vm535, %v536, %v477
    %v538 = vshrl.u32 %v537, 3
    %v539 = vand.u32 %v537, 7
    %v540 = vsub.s32 0, %v539
    %v541 = vsel %vm535, %v540, %v539
    %vm542 = vcmp.lt.s32.totalorder %v478, 0
    %v543 = vsub.s32 0, %v478
    %v544 = vsel %vm542, %v543, %v478
    %v545 = vshrl.u32 %v544, 3
    %v546 = vand.u32 %v544, 7
    %v547 = vsub.s32 0, %v546
    %v548 = vsel %vm542, %v547, %v546
    %vm549 = vcmp.lt.s32.totalorder %v479, 0
    %v550 = vsub.s32 0, %v479
    %v551 = vsel %vm549, %v550, %v479
    %v552 = vshrl.u32 %v551, 3
    %v553 = vand.u32 %v551, 7
    %v554 = vsub.s32 0, %v553
    %v555 = vsel %vm549, %v554, %v553
    %vm556 = vcmp.lt.s32.totalorder %v480, 0
    %v557 = vsub.s32 0, %v480
    %v558 = vsel %vm556, %v557, %v480
    %v559 = vshrl.u32 %v558, 3
    %v560 = vand.u32 %v558, 7
    %v561 = vsub.s32 0, %v560
    %v562 = vsel %vm556, %v561, %v560
    %vm563 = vcmp.lt.s32.totalorder %v481, 0
    %v564 = vsub.s32 0, %v481
    %v565 = vsel %vm563, %v564, %v481
    %v566 = vshrl.u32 %v565, 3
    %v567 = vand.u32 %v565, 7
    %v568 = vsub.s32 0, %v567
    %v569 = vsel %vm563, %v568, %v567
    %vm570 = vcmp.lt.s32.totalorder %v482, 0
    %v571 = vsub.s32 0, %v482
    %v572 = vsel %vm570, %v571, %v482
    %v573 = vshrl.u32 %v572, 3
    %v574 = vand.u32 %v572, 7
    %v575 = vsub.s32 0, %v574
    %v576 = vsel %vm570, %v575, %v574
    %vm577 = vcmp.lt.s32.totalorder %v483, 0
    %v578 = vsub.s32 0, %v483
    %v579 = vsel %vm577, %v578, %v483
    %v580 = vshrl.u32 %v579, 3
    %v581 = vand.u32 %v579, 7
    %v582 = vsub.s32 0, %v581
    %v583 = vsel %vm577, %v582, %v581
    %vm584 = vcmp.lt.s32.totalorder %v484, 0
    %v585 = vsub.s32 0, %v484
    %v586 = vsel %vm584, %v585, %v484
    %v587 = vshrl.u32 %v586, 3
    %v588 = vand.u32 %v586, 7
    %v589 = vsub.s32 0, %v588
    %v590 = vsel %vm584, %v589, %v588
    %vm591 = vcmp.lt.s32.totalorder %v485, 0
    %v592 = vsub.s32 0, %v485
    %v593 = vsel %vm591, %v592, %v485
    %v594 = vshrl.u32 %v593, 3
    %v595 = vand.u32 %v593, 7
    %v596 = vsub.s32 0, %v595
    %v597 = vsel %vm591, %v596, %v595
    %vm598 = vcmp.ne.s32.totalorder %v492, 0
    %vm599 = vcmp.ne.s32.totalorder %v499, 0
    %vm600 = vcmp.ne.s32.totalorder %v506, 0
    %vm601 = vcmp.ne.s32.totalorder %v513, 0
    %vm602 = vcmp.ne.s32.totalorder %v520, 0
    %vm603 = vcmp.ne.s32.totalorder %v527, 0
    %vm604 = vcmp.ne.s32.totalorder %v534, 0
    %vm605 = vcmp.ne.s32.totalorder %v541, 0
    %vm606 = vcmp.ne.s32.totalorder %v548, 0
    %vm607 = vcmp.ne.s32.totalorder %v555, 0
    %vm608 = vcmp.ne.s32.totalorder %v562, 0
    %vm609 = vcmp.ne.s32.totalorder %v569, 0
    %vm610 = vcmp.ne.s32.totalorder %v576, 0
    %vm611 = vcmp.ne.s32.totalorder %v583, 0
    %vm612 = vcmp.ne.s32.totalorder %v590, 0
    %vm613 = vcmp.ne.s32.totalorder %v597, 0
    %vm614 = vcmp.lt.s32.totalorder %v492, 0
    %vm615 = vcmp.lt.s32.totalorder %v499, 0
    %vm616 = vcmp.lt.s32.totalorder %v506, 0
    %vm617 = vcmp.lt.s32.totalorder %v513, 0
    %vm618 = vcmp.lt.s32.totalorder %v520, 0
    %vm619 = vcmp.lt.s32.totalorder %v527, 0
    %vm620 = vcmp.lt.s32.totalorder %v534, 0
    %vm621 = vcmp.lt.s32.totalorder %v541, 0
    %vm622 = vcmp.lt.s32.totalorder %v548, 0
    %vm623 = vcmp.lt.s32.totalorder %v555, 0
    %vm624 = vcmp.lt.s32.totalorder %v562, 0
    %vm625 = vcmp.lt.s32.totalorder %v569, 0
    %vm626 = vcmp.lt.s32.totalorder %v576, 0
    %vm627 = vcmp.lt.s32.totalorder %v583, 0
    %vm628 = vcmp.lt.s32.totalorder %v590, 0
    %vm629 = vcmp.lt.s32.totalorder %v597, 0
    %vm630 = vmand %vm614, %vm598
    %vm631 = vmand %vm615, %vm599
    %vm632 = vmand %vm616, %vm600
    %vm633 = vmand %vm617, %vm601
    %vm634 = vmand %vm618, %vm602
    %vm635 = vmand %vm619, %vm603
    %vm636 = vmand %vm620, %vm604
    %vm637 = vmand %vm621, %vm605
    %vm638 = vmand %vm622, %vm606
    %vm639 = vmand %vm623, %vm607
    %vm640 = vmand %vm624, %vm608
    %vm641 = vmand %vm625, %vm609
    %vm642 = vmand %vm626, %vm610
    %vm643 = vmand %vm627, %vm611
    %vm644 = vmand %vm628, %vm612
    %vm645 = vmand %vm629, %vm613
    %v646 = vadd.s32 %v492, 8
    %v647 = vadd.s32 %v499, 8
    %v648 = vadd.s32 %v506, 8
    %v649 = vadd.s32 %v513, 8
    %v650 = vadd.s32 %v520, 8
    %v651 = vadd.s32 %v527, 8
    %v652 = vadd.s32 %v534, 8
    %v653 = vadd.s32 %v541, 8
    %v654 = vadd.s32 %v548, 8
    %v655 = vadd.s32 %v555, 8
    %v656 = vadd.s32 %v562, 8
    %v657 = vadd.s32 %v569, 8
    %v658 = vadd.s32 %v576, 8
    %v659 = vadd.s32 %v583, 8
    %v660 = vadd.s32 %v590, 8
    %v661 = vadd.s32 %v597, 8
    %v662 = vsel %vm630, %v646, %v492
    %v663 = vsel %vm631, %v647, %v499
    %v664 = vsel %vm632, %v648, %v506
    %v665 = vsel %vm633, %v649, %v513
    %v666 = vsel %vm634, %v650, %v520
    %v667 = vsel %vm635, %v651, %v527
    %v668 = vsel %vm636, %v652, %v534
    %v669 = vsel %vm637, %v653, %v541
    %v670 = vsel %vm638, %v654, %v548
    %v671 = vsel %vm639, %v655, %v555
    %v672 = vsel %vm640, %v656, %v562
    %v673 = vsel %vm641, %v657, %v569
    %v674 = vsel %vm642, %v658, %v576
    %v675 = vsel %vm643, %v659, %v583
    %v676 = vsel %vm644, %v660, %v590
    %v677 = vsel %vm645, %v661, %v597
    %v678 = vlaneseq
    %v679 = vand.u32 %v678, 127
    %vm680 = vcmp.eq.s32.totalorder %v662, %v679
    %vm681 = vcmp.eq.s32.totalorder %v663, %v679
    %vm682 = vcmp.eq.s32.totalorder %v664, %v679
    %vm683 = vcmp.eq.s32.totalorder %v665, %v679
    %vm684 = vcmp.eq.s32.totalorder %v666, %v679
    %vm685 = vcmp.eq.s32.totalorder %v667, %v679
    %vm686 = vcmp.eq.s32.totalorder %v668, %v679
    %vm687 = vcmp.eq.s32.totalorder %v669, %v679
    %vm688 = vcmp.eq.s32.totalorder %v670, %v679
    %vm689 = vcmp.eq.s32.totalorder %v671, %v679
    %vm690 = vcmp.eq.s32.totalorder %v672, %v679
    %vm691 = vcmp.eq.s32.totalorder %v673, %v679
    %vm692 = vcmp.eq.s32.totalorder %v674, %v679
    %vm693 = vcmp.eq.s32.totalorder %v675, %v679
    %vm694 = vcmp.eq.s32.totalorder %v676, %v679
    %vm695 = vcmp.eq.s32.totalorder %v677, %v679
    %v696 = vsel %vm680, 1, 0
    %v697 = vsel %vm681, 1, 0
    %v698 = vsel %vm682, 1, 0
    %v699 = vsel %vm683, 1, 0
    %v700 = vsel %vm684, 1, 0
    %v701 = vsel %vm685, 1, 0
    %v702 = vsel %vm686, 1, 0
    %v703 = vsel %vm687, 1, 0
    %v704 = vsel %vm688, 1, 0
    %v705 = vsel %vm689, 1, 0
    %v706 = vsel %vm690, 1, 0
    %v707 = vsel %vm691, 1, 0
    %v708 = vsel %vm692, 1, 0
    %v709 = vsel %vm693, 1, 0
    %v710 = vsel %vm694, 1, 0
    %v711 = vsel %vm695, 1, 0
    %v712 = vcvt.s32.f32 %v696
    %v713 = vcvt.s32.f32 %v697
    %v714 = vcvt.s32.f32 %v698
    %v715 = vcvt.s32.f32 %v699
    %v716 = vcvt.s32.f32 %v700
    %v717 = vcvt.s32.f32 %v701
    %v718 = vcvt.s32.f32 %v702
    %v719 = vcvt.s32.f32 %v703
    %v720 = vcvt.s32.f32 %v704
    %v721 = vcvt.s32.f32 %v705
    %v722 = vcvt.s32.f32 %v706
    %v723 = vcvt.s32.f32 %v707
    %v724 = vcvt.s32.f32 %v708
    %v725 = vcvt.s32.f32 %v709
    %v726 = vcvt.s32.f32 %v710
    %v727 = vcvt.s32.f32 %v711
    %728 = vmatprep.subr.mxu0 0.0
    %729 = vmatpush1.msra.mxu0 %v712
    %730 = vmatprep.subr.mxu0 0.0
    %731 = vmatpush1.msra.mxu0 %v713
    %732 = vmatprep.subr.mxu0 0.0
    %733 = vmatpush1.msra.mxu0 %v714
    %734 = vmatprep.subr.mxu0 0.0
    %735 = vmatpush1.msra.mxu0 %v715
    %736 = vmatprep.subr.mxu0 0.0
    %737 = vmatpush1.msra.mxu0 %v716
    %738 = vmatprep.subr.mxu0 0.0
    %739 = vmatpush1.msra.mxu0 %v717
    %740 = vmatprep.subr.mxu0 0.0
    %741 = vmatpush1.msra.mxu0 %v718
    %742 = vmatprep.subr.mxu0 0.0
    %743 = vmatpush1.msra.mxu0 %v719
    %744 = vmatprep.subr.mxu0 0.0
    %745 = vmatpush1.msra.mxu0 %v720
    %746 = vmatprep.subr.mxu0 0.0
    %747 = vmatpush1.msra.mxu0 %v721
    %748 = vmatprep.subr.mxu0 0.0
    %749 = vmatpush1.msra.mxu0 %v722
    %750 = vmatprep.subr.mxu0 0.0
    %751 = vmatpush1.msra.mxu0 %v723
    %752 = vmatprep.subr.mxu0 0.0
    %753 = vmatpush1.msra.mxu0 %v724
    %754 = vmatprep.subr.mxu0 0.0
    %755 = vmatpush1.msra.mxu0 %v725
    %756 = vmatprep.subr.mxu0 0.0
    %757 = vmatpush1.msra.mxu0 %v726
    %758 = vmatprep.subr.mxu0 0.0
    %759 = vmatpush1.msra.mxu0 %v727
    %760 = vmatprep.subr.mxu0 0.0
    %761 = vmatpush1.msra.mxu0 0.0
    %762 = vmatprep.subr.mxu0 0.0
    %763 = vmatpush1.msra.mxu0 0.0
    %764 = vmatprep.subr.mxu0 0.0
    %765 = vmatpush1.msra.mxu0 0.0
    %766 = vmatprep.subr.mxu0 0.0
    %767 = vmatpush1.msra.mxu0 0.0
    %768 = vmatprep.subr.mxu0 0.0
    %769 = vmatpush1.msra.mxu0 0.0
    %770 = vmatprep.subr.mxu0 0.0
    %771 = vmatpush1.msra.mxu0 0.0
    %772 = vmatprep.subr.mxu0 0.0
    %773 = vmatpush1.msra.mxu0 0.0
    %774 = vmatprep.subr.mxu0 0.0
    %775 = vmatpush1.msra.mxu0 0.0
    %776 = vmatprep.subr.mxu0 0.0
    %777 = vmatpush1.msra.mxu0 0.0
    %778 = vmatprep.subr.mxu0 0.0
    %779 = vmatpush1.msra.mxu0 0.0
    %780 = vmatprep.subr.mxu0 0.0
    %781 = vmatpush1.msra.mxu0 0.0
    %782 = vmatprep.subr.mxu0 0.0
    %783 = vmatpush1.msra.mxu0 0.0
    %784 = vmatprep.subr.mxu0 0.0
    %785 = vmatpush1.msra.mxu0 0.0
    %786 = vmatprep.subr.mxu0 0.0
    %787 = vmatpush1.msra.mxu0 0.0
    %788 = vmatprep.subr.mxu0 0.0
    %789 = vmatpush1.msra.mxu0 0.0
    %790 = vmatprep.subr.mxu0 0.0
    %791 = vmatpush1.msra.mxu0 0.0
    %792 = vmatprep.mubr.f32.mxu0 0.0
    %793 = vmatmul.mubr.f32.gmra.mrb[0].mxu0 %v455
    %v794 = vpop.f32.mrb[0].mxu0
    %v795 = vadd.f32 0.0, %v794
    %v796 = vpop.f32.mrb[0].mxu0
    %797 = vdwg.mxu0
    %798 = vmatprep.subr.mxu0 0.0
    %799 = vmatpush1.msra.mxu0 %v712
    %800 = vmatprep.subr.mxu0 0.0
    %801 = vmatpush1.msra.mxu0 %v713
    %802 = vmatprep.subr.mxu0 0.0
    %803 = vmatpush1.msra.mxu0 %v714
    %804 = vmatprep.subr.mxu0 0.0
    %805 = vmatpush1.msra.mxu0 %v715
    %806 = vmatprep.subr.mxu0 0.0
    %807 = vmatpush1.msra.mxu0 %v716
    %808 = vmatprep.subr.mxu0 0.0
    %809 = vmatpush1.msra.mxu0 %v717
    %810 = vmatprep.subr.mxu0 0.0
    %811 = vmatpush1.msra.mxu0 %v718
    %812 = vmatprep.subr.mxu0 0.0
    %813 = vmatpush1.msra.mxu0 %v719
    %814 = vmatprep.subr.mxu0 0.0
    %815 = vmatpush1.msra.mxu0 %v720
    %816 = vmatprep.subr.mxu0 0.0
    %817 = vmatpush1.msra.mxu0 %v721
    %818 = vmatprep.subr.mxu0 0.0
    %819 = vmatpush1.msra.mxu0 %v722
    %820 = vmatprep.subr.mxu0 0.0
    %821 = vmatpush1.msra.mxu0 %v723
    %822 = vmatprep.subr.mxu0 0.0
    %823 = vmatpush1.msra.mxu0 %v724
    %824 = vmatprep.subr.mxu0 0.0
    %825 = vmatpush1.msra.mxu0 %v725
    %826 = vmatprep.subr.mxu0 0.0
    %827 = vmatpush1.msra.mxu0 %v726
    %828 = vmatprep.subr.mxu0 0.0
    %829 = vmatpush1.msra.mxu0 %v727
    %830 = vmatprep.subr.mxu0 0.0
    %831 = vmatpush1.msra.mxu0 0.0
    %832 = vmatprep.subr.mxu0 0.0
    %833 = vmatpush1.msra.mxu0 0.0
    %834 = vmatprep.subr.mxu0 0.0
    %835 = vmatpush1.msra.mxu0 0.0
    %836 = vmatprep.subr.mxu0 0.0
    %837 = vmatpush1.msra.mxu0 0.0
    %838 = vmatprep.subr.mxu0 0.0
    %839 = vmatpush1.msra.mxu0 0.0
    %840 = vmatprep.subr.mxu0 0.0
    %841 = vmatpush1.msra.mxu0 0.0
    %842 = vmatprep.subr.mxu0 0.0
    %843 = vmatpush1.msra.mxu0 0.0
    %844 = vmatprep.subr.mxu0 0.0
    %845 = vmatpush1.msra.mxu0 0.0
    %846 = vmatprep.subr.mxu0 0.0
    %847 = vmatpush1.msra.mxu0 0.0
    %848 = vmatprep.subr.mxu0 0.0
    %849 = vmatpush1.msra.mxu0 0.0
    %850 = vmatprep.subr.mxu0 0.0
    %851 = vmatpush1.msra.mxu0 0.0
    %852 = vmatprep.subr.mxu0 0.0
    %853 = vmatpush1.msra.mxu0 0.0
    %854 = vmatprep.subr.mxu0 0.0
    %855 = vmatpush1.msra.mxu0 0.0
    %856 = vmatprep.subr.mxu0 0.0
    %857 = vmatpush1.msra.mxu0 0.0
    %858 = vmatprep.subr.mxu0 0.0
    %859 = vmatpush1.msra.mxu0 0.0
    %860 = vmatprep.subr.mxu0 0.0
    %861 = vmatpush1.msra.mxu0 0.0
    %862 = vmatprep.mubr.f32.mxu0 0.0
    %863 = vmatmul.mubr.f32.gmra.mrb[0].mxu0 %v468
    %v864 = vpop.f32.mrb[0].mxu0
    %v865 = vadd.f32 0.0, %v864
    %v866 = vpop.f32.mrb[0].mxu0
    %867 = vdwg.mxu0
    %v868 = vmul.f32 %v795, 0.001953125
    %v869 = vmul.f32 %v865, 0.001953125
    %v870 = vmul.f32 %v868, %v868
    %v871 = vsub.f32 %v869, %v870
    %v872 = vld [vmem:[%s2] sm:$0x1]
    %v873 = vadd.f32 %v871, 1e-05
    %v874 = vrsqrt.pop %v873
    %v875 = vmul.f32 %v872, %v874
    %v876 = vld [vmem:[%s3] sm:$0x1]
    %v877 = vmul.f32 %v868, %v875
    %v878 = vsub.f32 %v876, %v877
    %vm879 = vcmp.lt.s32.totalorder %v679, 0
    %v880 = vsub.s32 0, %v679
    %v881 = vsel %vm879, %v880, %v679
    %v882 = vshrl.u32 %v881, 3
    %v883 = vand.u32 %v881, 7
    %v884 = vsub.s32 0, %v883
    %v885 = vsel %vm879, %v884, %v883
    %vm886 = vcmp.ne.s32.totalorder %v885, 0
    %vm887 = vcmp.lt.s32.totalorder %v885, 0
    %vm888 = vmand %vm887, %vm886
    %v889 = vadd.s32 %v885, 8
    %v890 = vsel %vm888, %v889, %v885
    %vm891 = vcmp.eq.s32.totalorder %v890, %v470
    %v892 = vsel %vm891, 1, 0
    %v893 = vcvt.s32.f32 %v892
    %vm894 = vcmask 64512
    %v896 = vsel %vm894, %v875, 0
    %898 = vmatprep.subr.mxu0 0.0
    %899 = vmatpush1.msra.mxu0 %v893
    %900 = vmatprep.subr.mxu0 0.0
    %901 = vmatpush1.msra.mxu0 0.0
    %902 = vmatprep.subr.mxu0 0.0
    %903 = vmatpush1.msra.mxu0 0.0
    %904 = vmatprep.subr.mxu0 0.0
    %905 = vmatpush1.msra.mxu0 0.0
    %906 = vmatprep.subr.mxu0 0.0
    %907 = vmatpush1.msra.mxu0 0.0
    %908 = vmatprep.subr.mxu0 0.0
    %909 = vmatpush1.msra.mxu0 0.0
    %910 = vmatprep.subr.mxu0 0.0
    %911 = vmatpush1.msra.mxu0 0.0
    %912 = vmatprep.subr.mxu0 0.0
    %913 = vmatpush1.msra.mxu0 0.0
    %914 = vmatprep.subr.mxu0 0.0
    %915 = vmatpush1.msra.mxu0 0.0
    %916 = vmatprep.subr.mxu0 0.0
    %917 = vmatpush1.msra.mxu0 0.0
    %918 = vmatprep.subr.mxu0 0.0
    %919 = vmatpush1.msra.mxu0 0.0
    %920 = vmatprep.subr.mxu0 0.0
    %921 = vmatpush1.msra.mxu0 0.0
    %922 = vmatprep.subr.mxu0 0.0
    %923 = vmatpush1.msra.mxu0 0.0
    %924 = vmatprep.subr.mxu0 0.0
    %925 = vmatpush1.msra.mxu0 0.0
    %926 = vmatprep.subr.mxu0 0.0
    %927 = vmatpush1.msra.mxu0 0.0
    %928 = vmatprep.subr.mxu0 0.0
    %929 = vmatpush1.msra.mxu0 0.0
    %930 = vmatprep.subr.mxu0 0.0
    %931 = vmatpush1.msra.mxu0 0.0
    %932 = vmatprep.subr.mxu0 0.0
    %933 = vmatpush1.msra.mxu0 0.0
    %934 = vmatprep.subr.mxu0 0.0
    %935 = vmatpush1.msra.mxu0 0.0
    %936 = vmatprep.subr.mxu0 0.0
    %937 = vmatpush1.msra.mxu0 0.0
    %938 = vmatprep.subr.mxu0 0.0
    %939 = vmatpush1.msra.mxu0 0.0
    %940 = vmatprep.subr.mxu0 0.0
    %941 = vmatpush1.msra.mxu0 0.0
    %942 = vmatprep.subr.mxu0 0.0
    %943 = vmatpush1.msra.mxu0 0.0
    %944 = vmatprep.subr.mxu0 0.0
    %945 = vmatpush1.msra.mxu0 0.0
    %946 = vmatprep.subr.mxu0 0.0
    %947 = vmatpush1.msra.mxu0 0.0
    %948 = vmatprep.subr.mxu0 0.0
    %949 = vmatpush1.msra.mxu0 0.0
    %950 = vmatprep.subr.mxu0 0.0
    %951 = vmatpush1.msra.mxu0 0.0
    %952 = vmatprep.subr.mxu0 0.0
    %953 = vmatpush1.msra.mxu0 0.0
    %954 = vmatprep.subr.mxu0 0.0
    %955 = vmatpush1.msra.mxu0 0.0
    %956 = vmatprep.subr.mxu0 0.0
    %957 = vmatpush1.msra.mxu0 0.0
    %958 = vmatprep.subr.mxu0 0.0
    %959 = vmatpush1.msra.mxu0 0.0
    %960 = vmatprep.subr.mxu0 0.0
    %961 = vmatpush1.msra.mxu0 0.0
    %962 = vmatprep.mubr.f32.mxu0 0.0
    %963 = vmatmul.mubr.f32.gmra.mrb[0].mxu0 %v896
    %v964 = vpop.f32.mrb[0].mxu0
    %v965 = vadd.f32 0.0, %v964
    %v966 = vpop.f32.mrb[0].mxu0
    %967 = vdwg.mxu0
    %v969 = vsel %vm894, %v878, 0
    %971 = vmatprep.subr.mxu0 0.0
    %972 = vmatpush1.msra.mxu0 %v893
    %973 = vmatprep.subr.mxu0 0.0
    %974 = vmatpush1.msra.mxu0 0.0
    %975 = vmatprep.subr.mxu0 0.0
    %976 = vmatpush1.msra.mxu0 0.0
    %977 = vmatprep.subr.mxu0 0.0
    %978 = vmatpush1.msra.mxu0 0.0
    %979 = vmatprep.subr.mxu0 0.0
    %980 = vmatpush1.msra.mxu0 0.0
    %981 = vmatprep.subr.mxu0 0.0
    %982 = vmatpush1.msra.mxu0 0.0
    %983 = vmatprep.subr.mxu0 0.0
    %984 = vmatpush1.msra.mxu0 0.0
    %985 = vmatprep.subr.mxu0 0.0
    %986 = vmatpush1.msra.mxu0 0.0
    %987 = vmatprep.subr.mxu0 0.0
    %988 = vmatpush1.msra.mxu0 0.0
    %989 = vmatprep.subr.mxu0 0.0
    %990 = vmatpush1.msra.mxu0 0.0
    %991 = vmatprep.subr.mxu0 0.0
    %992 = vmatpush1.msra.mxu0 0.0
    %993 = vmatprep.subr.mxu0 0.0
    %994 = vmatpush1.msra.mxu0 0.0
    %995 = vmatprep.subr.mxu0 0.0
    %996 = vmatpush1.msra.mxu0 0.0
    %997 = vmatprep.subr.mxu0 0.0
    %998 = vmatpush1.msra.mxu0 0.0
    %999 = vmatprep.subr.mxu0 0.0
    %1000 = vmatpush1.msra.mxu0 0.0
    %1001 = vmatprep.subr.mxu0 0.0
    %1002 = vmatpush1.msra.mxu0 0.0
    %1003 = vmatprep.subr.mxu0 0.0
    %1004 = vmatpush1.msra.mxu0 0.0
    %1005 = vmatprep.subr.mxu0 0.0
    %1006 = vmatpush1.msra.mxu0 0.0
    %1007 = vmatprep.subr.mxu0 0.0
    %1008 = vmatpush1.msra.mxu0 0.0
    %1009 = vmatprep.subr.mxu0 0.0
    %1010 = vmatpush1.msra.mxu0 0.0
    %1011 = vmatprep.subr.mxu0 0.0
    %1012 = vmatpush1.msra.mxu0 0.0
    %1013 = vmatprep.subr.mxu0 0.0
    %1014 = vmatpush1.msra.mxu0 0.0
    %1015 = vmatprep.subr.mxu0 0.0
    %1016 = vmatpush1.msra.mxu0 0.0
    %1017 = vmatprep.subr.mxu0 0.0
    %1018 = vmatpush1.msra.mxu0 0.0
    %1019 = vmatprep.subr.mxu0 0.0
    %1020 = vmatpush1.msra.mxu0 0.0
    %1021 = vmatprep.subr.mxu0 0.0
    %1022 = vmatpush1.msra.mxu0 0.0
    %1023 = vmatprep.subr.mxu0 0.0
    %1024 = vmatpush1.msra.mxu0 0.0
    %1025 = vmatprep.subr.mxu0 0.0
    %1026 = vmatpush1.msra.mxu0 0.0
    %1027 = vmatprep.subr.mxu0 0.0
    %1028 = vmatpush1.msra.mxu0 0.0
    %1029 = vmatprep.subr.mxu0 0.0
    %1030 = vmatpush1.msra.mxu0 0.0
    %1031 = vmatprep.subr.mxu0 0.0
    %1032 = vmatpush1.msra.mxu0 0.0
    %1033 = vmatprep.subr.mxu0 0.0
    %1034 = vmatpush1.msra.mxu0 0.0
    %1035 = vmatprep.mubr.f32.mxu0 0.0
    %1036 = vmatmul.mubr.f32.gmra.mrb[0].mxu0 %v969
    %v1037 = vpop.f32.mrb[0].mxu0
    %v1038 = vadd.f32 0.0, %v1037
    %v1039 = vpop.f32.mrb[0].mxu0
    %1040 = vdwg.mxu0
    %v1041 = vlaneseq
    %v1042 = vshrl.u32 %v1041, 7
    %v1043 = vsub.s32 0, %v1042
    %v1044 = vrot.slane %v965, %v1043
    %v1045 = vmul.f32 %v443, %v1044
    %v1046 = vmul.f32 %v444, %v1044
    %v1047 = vmul.f32 %v445, %v1044
    %v1048 = vmul.f32 %v446, %v1044
    %v1049 = vlaneseq
    %v1050 = vshrl.u32 %v1049, 7
    %v1051 = vsub.s32 0, %v1050
    %v1052 = vrot.slane %v1038, %v1051
    %v1053 = vadd.f32 %v1045, %v1052
    %v1054 = vadd.f32 %v1046, %v1052
    %v1055 = vadd.f32 %v1047, %v1052
    %v1056 = vadd.f32 %v1048, %v1052
    %v1057 = vmax.f32 %v1053, 0.0
    %v1058 = vmax.f32 %v1054, 0.0
    %v1059 = vmax.f32 %v1055, 0.0
    %v1060 = vmax.f32 %v1056, 0.0
    %1061 = vst [vmem:[#allocation3] sm:$0xff] 0.0
    %1062 = vst [vmem:[#allocation3 + $0x8] sm:$0xff] 0.0
    %1063 = vst [vmem:[#allocation3 + $0x10] sm:$0xff] 0.0
    %1064 = vst [vmem:[#allocation3 + $0x18] sm:$0xff] 0.0
    %1065 = vst [vmem:[#allocation3 + $0x20] sm:$0x3] 0.0
    %1066 = vst [vmem:[#allocation3 + $0x28] sm:$0x3] 0.0
    %1067 = vst [vmem:[#allocation3 + $0x30] sm:$0xff] 0.0
    %1068 = vst [vmem:[#allocation3 + $0x38] sm:$0xff] 0.0
    %1069 = vst [vmem:[#allocation3 + $0x40] sm:$0xff] 0.0
    %1070 = vst [vmem:[#allocation3 + $0x48] sm:$0xff] 0.0
    %1071 = vst [vmem:[#allocation3 + $0x50] sm:$0x3] 0.0
    %1072 = vst [vmem:[#allocation3 + $0x58] sm:$0x3] 0.0
    %vm1077 = vcmask 1040384
    %v1078 = vrot.slane %v1057, 7
    %v1079 = vrot.slane %v1058, 7
    %v1080 = vsel %vm1077, %v1078, %v1079
    %v1081 = vrot.slane %v1059, 7
    %v1082 = vrot.slane %v1060, 7
    %v1083 = vsel %vm1077, %v1081, %v1082
    %1090 = vst [vmem:[#allocation3] sm:$0xfe] %v1078
    %1091 = vst [vmem:[#allocation3 + $0x10] sm:$0xff] %v1080
    %1092 = vst [vmem:[#allocation3 + $0x20] sm:$0x1] %v1079
    %1093 = vst [vmem:[#allocation3 + $0x30] sm:$0xfe] %v1081
    %1094 = vst [vmem:[#allocation3 + $0x40] sm:$0xff] %v1083
    %1095 = vst [vmem:[#allocation3 + $0x50] sm:$0x1] %v1082
    %v1096 = vld [vmem:[#allocation3] sm:$0xff]
    %v1097 = vld [vmem:[#allocation3 + $0x8] sm:$0xff]
    %v1098 = vld [vmem:[#allocation3 + $0x10] sm:$0xff]
    %v1099 = vld [vmem:[#allocation3 + $0x18] sm:$0xff]
    %v1100 = vld [vmem:[#allocation3 + $0x30] sm:$0xff]
    %v1101 = vld [vmem:[#allocation3 + $0x38] sm:$0xff]
    %v1102 = vld [vmem:[#allocation3 + $0x40] sm:$0xff]
    %v1103 = vld [vmem:[#allocation3 + $0x48] sm:$0xff]
    %v1104 = vpack.c.bf16 %v1098, %v1096
    %v1105 = vpack.c.bf16 %v1099, %v1097
    %v1106 = vpack.c.bf16 %v1102, %v1100
    %v1107 = vpack.c.bf16 %v1103, %v1101
    %v1108 = vld [vmem:[#allocation9] sm:$0xf]
    %v1109 = vld [vmem:[#allocation9 + $0x4] sm:$0xf]
    %v1110 = vld [vmem:[#allocation9 + $0x8] sm:$0xf]
    %v1111 = vld [vmem:[#allocation9 + $0xc] sm:$0xf]
    %v1112 = vld [vmem:[#allocation9 + $0x10] sm:$0xf]
    %v1113 = vld [vmem:[#allocation9 + $0x14] sm:$0xf]
    %v1114 = vld [vmem:[#allocation9 + $0x18] sm:$0xf]
    %v1115 = vld [vmem:[#allocation9 + $0x1c] sm:$0xf]
    %v1116 = vld [vmem:[#allocation9 + $0x20] sm:$0xf]
    %v1117 = vld [vmem:[#allocation9 + $0x24] sm:$0xf]
    %v1118 = vld [vmem:[#allocation9 + $0x28] sm:$0xf]
    %v1119 = vld [vmem:[#allocation9 + $0x2c] sm:$0xf]
    %v1120 = vld [vmem:[#allocation9 + $0x30] sm:$0xf]
    %v1121 = vld [vmem:[#allocation9 + $0x34] sm:$0xf]
    %v1122 = vld [vmem:[#allocation9 + $0x38] sm:$0xf]
    %v1123 = vld [vmem:[#allocation9 + $0x3c] sm:$0xf]
    %v1124 = vld [vmem:[#allocation9 + $0x40] sm:$0xf]
    %v1125 = vld [vmem:[#allocation9 + $0x44] sm:$0xf]
    %v1126 = vld [vmem:[#allocation9 + $0x48] sm:$0xf]
    %v1127 = vld [vmem:[#allocation9 + $0x4c] sm:$0xf]
    %v1128 = vld [vmem:[#allocation9 + $0x50] sm:$0xf]
    %v1129 = vld [vmem:[#allocation9 + $0x54] sm:$0xf]
    %v1130 = vld [vmem:[#allocation9 + $0x58] sm:$0xf]
    %v1131 = vld [vmem:[#allocation9 + $0x5c] sm:$0xf]
    %v1132 = vld [vmem:[#allocation9 + $0x60] sm:$0xf]
    %v1133 = vld [vmem:[#allocation9 + $0x64] sm:$0xf]
    %v1134 = vld [vmem:[#allocation9 + $0x68] sm:$0xf]
    %v1135 = vld [vmem:[#allocation9 + $0x6c] sm:$0xf]
    %v1136 = vld [vmem:[#allocation9 + $0x70] sm:$0xf]
    %v1137 = vld [vmem:[#allocation9 + $0x74] sm:$0xf]
    %v1138 = vld [vmem:[#allocation9 + $0x78] sm:$0xf]
    %v1139 = vld [vmem:[#allocation9 + $0x7c] sm:$0xf]
    %v1140 = vld [vmem:[#allocation3] sm:$0xfe]
    %v1141 = vld [vmem:[#allocation3 + $0x8] sm:$0xfe]
    %v1142 = vld [vmem:[#allocation3 + $0x20] sm:$0x1]
    %v1143 = vld [vmem:[#allocation3 + $0x28] sm:$0x1]
    %v1144 = vld [vmem:[#allocation3 + $0x30] sm:$0xfe]
    %v1145 = vld [vmem:[#allocation3 + $0x38] sm:$0xfe]
    %v1146 = vld [vmem:[#allocation3 + $0x50] sm:$0x1]
    %v1147 = vld [vmem:[#allocation3 + $0x58] sm:$0x1]
    %vm1160 = vcmask 1046528
    %v1161 = vrot.slane %v1140, 1
    %v1162 = vrot.slane %v1098, 1
    %v1163 = vsel %vm1160, %v1161, %v1162
    %v1164 = vrot.slane %v1141, 1
    %v1165 = vrot.slane %v1099, 1
    %v1166 = vsel %vm1160, %v1164, %v1165
    %v1167 = vrot.slane %v1142, 1
    %v1168 = vsel %vm1160, %v1162, %v1167
    %v1169 = vrot.slane %v1143, 1
    %v1170 = vsel %vm1160, %v1165, %v1169
    %v1171 = vrot.slane %v1144, 1
    %v1172 = vrot.slane %v1102, 1
    %v1173 = vsel %vm1160, %v1171, %v1172
    %v1174 = vrot.slane %v1145, 1
    %v1175 = vrot.slane %v1103, 1
    %v1176 = vsel %vm1160, %v1174, %v1175
    %v1177 = vrot.slane %v1146, 1
    %v1178 = vsel %vm1160, %v1172, %v1177
    %v1179 = vrot.slane %v1147, 1
    %v1180 = vsel %vm1160, %v1175, %v1179
    %v1189 = vpack.c.bf16 %v1168, %v1163
    %v1190 = vpack.c.bf16 %v1170, %v1166
    %v1191 = vpack.c.bf16 %v1178, %v1173
    %v1192 = vpack.c.bf16 %v1180, %v1176
    %s1193 = scalar_lea.vmem [#allocation9], 128
    %v1194 = vld [vmem:[%s1193] sm:$0xf]
    %v1195 = vld [vmem:[%s1193 + $0x4] sm:$0xf]
    %v1196 = vld [vmem:[%s1193 + $0x8] sm:$0xf]
    %v1197 = vld [vmem:[%s1193 + $0xc] sm:$0xf]
    %v1198 = vld [vmem:[%s1193 + $0x10] sm:$0xf]
    %v1199 = vld [vmem:[%s1193 + $0x14] sm:$0xf]
    %v1200 = vld [vmem:[%s1193 + $0x18] sm:$0xf]
    %v1201 = vld [vmem:[%s1193 + $0x1c] sm:$0xf]
    %v1202 = vld [vmem:[%s1193 + $0x20] sm:$0xf]
    %v1203 = vld [vmem:[%s1193 + $0x24] sm:$0xf]
    %v1204 = vld [vmem:[%s1193 + $0x28] sm:$0xf]
    %v1205 = vld [vmem:[%s1193 + $0x2c] sm:$0xf]
    %v1206 = vld [vmem:[%s1193 + $0x30] sm:$0xf]
    %v1207 = vld [vmem:[%s1193 + $0x34] sm:$0xf]
    %v1208 = vld [vmem:[%s1193 + $0x38] sm:$0xf]
    %v1209 = vld [vmem:[%s1193 + $0x3c] sm:$0xf]
    %v1210 = vld [vmem:[%s1193 + $0x40] sm:$0xf]
    %v1211 = vld [vmem:[%s1193 + $0x44] sm:$0xf]
    %v1212 = vld [vmem:[%s1193 + $0x48] sm:$0xf]
    %v1213 = vld [vmem:[%s1193 + $0x4c] sm:$0xf]
    %v1214 = vld [vmem:[%s1193 + $0x50] sm:$0xf]
    %v1215 = vld [vmem:[%s1193 + $0x54] sm:$0xf]
    %v1216 = vld [vmem:[%s1193 + $0x58] sm:$0xf]
    %v1217 = vld [vmem:[%s1193 + $0x5c] sm:$0xf]
    %v1218 = vld [vmem:[%s1193 + $0x60] sm:$0xf]
    %v1219 = vld [vmem:[%s1193 + $0x64] sm:$0xf]
    %v1220 = vld [vmem:[%s1193 + $0x68] sm:$0xf]
    %v1221 = vld [vmem:[%s1193 + $0x6c] sm:$0xf]
    %v1222 = vld [vmem:[%s1193 + $0x70] sm:$0xf]
    %v1223 = vld [vmem:[%s1193 + $0x74] sm:$0xf]
    %v1224 = vld [vmem:[%s1193 + $0x78] sm:$0xf]
    %v1225 = vld [vmem:[%s1193 + $0x7c] sm:$0xf]
    %v1258 = vunpack.c.l.b16 %v1194
    %v1259 = vunpack.c.l.b16 %v1195
    %v1260 = vunpack.c.l.b16 %v1196
    %v1261 = vunpack.c.l.b16 %v1197
    %v1262 = vunpack.c.l.b16 %v1198
    %v1263 = vunpack.c.l.b16 %v1199
    %v1264 = vunpack.c.l.b16 %v1200
    %v1265 = vunpack.c.l.b16 %v1201
    %v1266 = vunpack.c.l.b16 %v1202
    %v1267 = vunpack.c.l.b16 %v1203
    %v1268 = vunpack.c.l.b16 %v1204
    %v1269 = vunpack.c.l.b16 %v1205
    %v1270 = vunpack.c.l.b16 %v1206
    %v1271 = vunpack.c.l.b16 %v1207
    %v1272 = vunpack.c.l.b16 %v1208
    %v1273 = vunpack.c.l.b16 %v1209
    %v1274 = vunpack.c.l.b16 %v1210
    %v1275 = vunpack.c.l.b16 %v1211
    %v1276 = vunpack.c.l.b16 %v1212
    %v1277 = vunpack.c.l.b16 %v1213
    %v1278 = vunpack.c.l.b16 %v1214
    %v1279 = vunpack.c.l.b16 %v1215
    %v1280 = vunpack.c.l.b16 %v1216
    %v1281 = vunpack.c.l.b16 %v1217
    %v1282 = vunpack.c.l.b16 %v1218
    %v1283 = vunpack.c.l.b16 %v1219
    %v1284 = vunpack.c.l.b16 %v1220
    %v1285 = vunpack.c.l.b16 %v1221
    %v1286 = vunpack.c.l.b16 %v1222
    %v1287 = vunpack.c.l.b16 %v1223
    %v1288 = vunpack.c.l.b16 %v1224
    %v1289 = vunpack.c.l.b16 %v1225
    %v1290 = vpack.c.b16 %v1259, %v1258
    %v1291 = vpack.c.b16 %v1261, %v1260
    %v1292 = vpack.c.b16 %v1263, %v1262
    %v1293 = vpack.c.b16 %v1265, %v1264
    %v1294 = vpack.c.b16 %v1267, %v1266
    %v1295 = vpack.c.b16 %v1269, %v1268
    %v1296 = vpack.c.b16 %v1271, %v1270
    %v1297 = vpack.c.b16 %v1273, %v1272
    %v1298 = vpack.c.b16 %v1275, %v1274
    %v1299 = vpack.c.b16 %v1277, %v1276
    %v1300 = vpack.c.b16 %v1279, %v1278
    %v1301 = vpack.c.b16 %v1281, %v1280
    %v1302 = vpack.c.b16 %v1283, %v1282
    %v1303 = vpack.c.b16 %v1285, %v1284
    %v1304 = vpack.c.b16 %v1287, %v1286
    %v1305 = vpack.c.b16 %v1289, %v1288
    %1322 = vmatprep.subr.bf16.mxu0 0
    %1323 = vmatpush1.bf16.msra.mxu0 %v1290
    %1324 = vmatprep.subr.bf16.mxu0 0
    %1325 = vmatpush1.bf16.msra.mxu0 %v1291
    %1326 = vmatprep.subr.bf16.mxu0 0
    %1327 = vmatpush1.bf16.msra.mxu0 %v1292
    %1328 = vmatprep.subr.bf16.mxu0 0
    %1329 = vmatpush1.bf16.msra.mxu0 %v1293
    %1330 = vmatprep.subr.bf16.mxu0 0
    %1331 = vmatpush1.bf16.msra.mxu0 %v1294
    %1332 = vmatprep.subr.bf16.mxu0 0
    %1333 = vmatpush1.bf16.msra.mxu0 %v1295
    %1334 = vmatprep.subr.bf16.mxu0 0
    %1335 = vmatpush1.bf16.msra.mxu0 %v1296
    %1336 = vmatprep.subr.bf16.mxu0 0
    %1337 = vmatpush1.bf16.msra.mxu0 %v1297
    %1338 = vmatprep.subr.bf16.mxu0 0
    %1339 = vmatpush1.bf16.msra.mxu0 %v1298
    %1340 = vmatprep.subr.bf16.mxu0 0
    %1341 = vmatpush1.bf16.msra.mxu0 %v1299
    %1342 = vmatprep.subr.bf16.mxu0 0
    %1343 = vmatpush1.bf16.msra.mxu0 %v1300
    %1344 = vmatprep.subr.bf16.mxu0 0
    %1345 = vmatpush1.bf16.msra.mxu0 %v1301
    %1346 = vmatprep.subr.bf16.mxu0 0
    %1347 = vmatpush1.bf16.msra.mxu0 %v1302
    %1348 = vmatprep.subr.bf16.mxu0 0
    %1349 = vmatpush1.bf16.msra.mxu0 %v1303
    %1350 = vmatprep.subr.bf16.mxu0 0
    %1351 = vmatpush1.bf16.msra.mxu0 %v1304
    %1352 = vmatprep.subr.bf16.mxu0 0
    %1353 = vmatpush1.bf16.msra.mxu0 %v1305
    %1354 = vmatprep.mubr.bf16.mxu0 %v1190
    %1355 = vmatmul.mubr.bf16.gmra.mrb[0].mxu0 %v1189
    %v1356 = vpop.f32.mrb[0].mxu0
    %v1357 = vadd.f32 0.0, %v1356
    %v1358 = vpop.f32.mrb[0].mxu0
    %v1359 = vpop.f32.mrb[0].mxu0
    %v1360 = vadd.f32 0.0, %v1359
    %v1361 = vpop.f32.mrb[0].mxu0
    %1362 = vmatprep.mubr.bf16.mxu0 %v1192
    %1363 = vmatmul.mubr.bf16.gmra.mrb[0].mxu0 %v1191
    %v1364 = vpop.f32.mrb[0].mxu0
    %v1365 = vadd.f32 0.0, %v1364
    %v1366 = vpop.f32.mrb[0].mxu0
    %v1367 = vpop.f32.mrb[0].mxu0
    %v1368 = vadd.f32 0.0, %v1367
    %v1369 = vpop.f32.mrb[0].mxu0
    %1370 = vdwg.mxu0
    %v1403 = vunpack.c.l.b16 %v1108
    %v1404 = vunpack.c.l.b16 %v1109
    %v1405 = vunpack.c.l.b16 %v1110
    %v1406 = vunpack.c.l.b16 %v1111
    %v1407 = vunpack.c.l.b16 %v1112
    %v1408 = vunpack.c.l.b16 %v1113
    %v1409 = vunpack.c.l.b16 %v1114
    %v1410 = vunpack.c.l.b16 %v1115
    %v1411 = vunpack.c.l.b16 %v1116
    %v1412 = vunpack.c.l.b16 %v1117
    %v1413 = vunpack.c.l.b16 %v1118
    %v1414 = vunpack.c.l.b16 %v1119
    %v1415 = vunpack.c.l.b16 %v1120
    %v1416 = vunpack.c.l.b16 %v1121
    %v1417 = vunpack.c.l.b16 %v1122
    %v1418 = vunpack.c.l.b16 %v1123
    %v1419 = vunpack.c.l.b16 %v1124
    %v1420 = vunpack.c.l.b16 %v1125
    %v1421 = vunpack.c.l.b16 %v1126
    %v1422 = vunpack.c.l.b16 %v1127
    %v1423 = vunpack.c.l.b16 %v1128
    %v1424 = vunpack.c.l.b16 %v1129
    %v1425 = vunpack.c.l.b16 %v1130
    %v1426 = vunpack.c.l.b16 %v1131
    %v1427 = vunpack.c.l.b16 %v1132
    %v1428 = vunpack.c.l.b16 %v1133
    %v1429 = vunpack.c.l.b16 %v1134
    %v1430 = vunpack.c.l.b16 %v1135
    %v1431 = vunpack.c.l.b16 %v1136
    %v1432 = vunpack.c.l.b16 %v1137
    %v1433 = vunpack.c.l.b16 %v1138
    %v1434 = vunpack.c.l.b16 %v1139
    %v1435 = vpack.c.b16 %v1404, %v1403
    %v1436 = vpack.c.b16 %v1406, %v1405
    %v1437 = vpack.c.b16 %v1408, %v1407
    %v1438 = vpack.c.b16 %v1410, %v1409
    %v1439 = vpack.c.b16 %v1412, %v1411
    %v1440 = vpack.c.b16 %v1414, %v1413
    %v1441 = vpack.c.b16 %v1416, %v1415
    %v1442 = vpack.c.b16 %v1418, %v1417
    %v1443 = vpack.c.b16 %v1420, %v1419
    %v1444 = vpack.c.b16 %v1422, %v1421
    %v1445 = vpack.c.b16 %v1424, %v1423
    %v1446 = vpack.c.b16 %v1426, %v1425
    %v1447 = vpack.c.b16 %v1428, %v1427
    %v1448 = vpack.c.b16 %v1430, %v1429
    %v1449 = vpack.c.b16 %v1432, %v1431
    %v1450 = vpack.c.b16 %v1434, %v1433
    %1467 = vmatprep.subr.bf16.mxu0 0
    %1468 = vmatpush1.bf16.msra.mxu0 %v1435
    %1469 = vmatprep.subr.bf16.mxu0 0
    %1470 = vmatpush1.bf16.msra.mxu0 %v1436
    %1471 = vmatprep.subr.bf16.mxu0 0
    %1472 = vmatpush1.bf16.msra.mxu0 %v1437
    %1473 = vmatprep.subr.bf16.mxu0 0
    %1474 = vmatpush1.bf16.msra.mxu0 %v1438
    %1475 = vmatprep.subr.bf16.mxu0 0
    %1476 = vmatpush1.bf16.msra.mxu0 %v1439
    %1477 = vmatprep.subr.bf16.mxu0 0
    %1478 = vmatpush1.bf16.msra.mxu0 %v1440
    %1479 = vmatprep.subr.bf16.mxu0 0
    %1480 = vmatpush1.bf16.msra.mxu0 %v1441
    %1481 = vmatprep.subr.bf16.mxu0 0
    %1482 = vmatpush1.bf16.msra.mxu0 %v1442
    %1483 = vmatprep.subr.bf16.mxu0 0
    %1484 = vmatpush1.bf16.msra.mxu0 %v1443
    %1485 = vmatprep.subr.bf16.mxu0 0
    %1486 = vmatpush1.bf16.msra.mxu0 %v1444
    %1487 = vmatprep.subr.bf16.mxu0 0
    %1488 = vmatpush1.bf16.msra.mxu0 %v1445
    %1489 = vmatprep.subr.bf16.mxu0 0
    %1490 = vmatpush1.bf16.msra.mxu0 %v1446
    %1491 = vmatprep.subr.bf16.mxu0 0
    %1492 = vmatpush1.bf16.msra.mxu0 %v1447
    %1493 = vmatprep.subr.bf16.mxu0 0
    %1494 = vmatpush1.bf16.msra.mxu0 %v1448
    %1495 = vmatprep.subr.bf16.mxu0 0
    %1496 = vmatpush1.bf16.msra.mxu0 %v1449
    %1497 = vmatprep.subr.bf16.mxu0 0
    %1498 = vmatpush1.bf16.msra.mxu0 %v1450
    %1499 = vmatprep.mubr.bf16.mxu0 %v1105
    %1500 = vmatmul.mubr.bf16.gmra.mrb[0].mxu0 %v1104
    %v1501 = vpop.f32.mrb[0].mxu0
    %v1502 = vadd.f32 %v1357, %v1501
    %v1503 = vpop.f32.mrb[0].mxu0
    %v1504 = vpop.f32.mrb[0].mxu0
    %v1505 = vadd.f32 %v1360, %v1504
    %v1506 = vpop.f32.mrb[0].mxu0
    %1507 = vmatprep.mubr.bf16.mxu0 %v1107
    %1508 = vmatmul.mubr.bf16.gmra.mrb[0].mxu0 %v1106
    %v1509 = vpop.f32.mrb[0].mxu0
    %v1510 = vadd.f32 %v1365, %v1509
    %v1511 = vpop.f32.mrb[0].mxu0
    %v1512 = vpop.f32.mrb[0].mxu0
    %v1513 = vadd.f32 %v1368, %v1512
    %v1514 = vpop.f32.mrb[0].mxu0
    %1515 = vdwg.mxu0
    %v1516 = vld [vmem:[#allocation3] sm:$0xfc]
    %v1517 = vld [vmem:[#allocation3 + $0x8] sm:$0xfc]
    %v1518 = vld [vmem:[#allocation3 + $0x20] sm:$0x3]
    %v1519 = vld [vmem:[#allocation3 + $0x28] sm:$0x3]
    %v1520 = vld [vmem:[#allocation3 + $0x30] sm:$0xfc]
    %v1521 = vld [vmem:[#allocation3 + $0x38] sm:$0xfc]
    %v1522 = vld [vmem:[#allocation3 + $0x50] sm:$0x3]
    %v1523 = vld [vmem:[#allocation3 + $0x58] sm:$0x3]
    %vm1532 = vcmask 1045504
    %v1533 = vrot.slane %v1516, 2
    %v1534 = vrot.slane %v1098, 2
    %v1535 = vsel %vm1532, %v1533, %v1534
    %v1536 = vrot.slane %v1517, 2
    %v1537 = vrot.slane %v1099, 2
    %v1538 = vsel %vm1532, %v1536, %v1537
    %v1539 = vrot.slane %v1518, 2
    %v1540 = vsel %vm1532, %v1534, %v1539
    %v1541 = vrot.slane %v1519, 2
    %v1542 = vsel %vm1532, %v1537, %v1541
    %v1543 = vrot.slane %v1520, 2
    %v1544 = vrot.slane %v1102, 2
    %v1545 = vsel %vm1532, %v1543, %v1544
    %v1546 = vrot.slane %v1521, 2
    %v1547 = vrot.slane %v1103, 2
    %v1548 = vsel %vm1532, %v1546, %v1547
    %v1549 = vrot.slane %v1522, 2
    %v1550 = vsel %vm1532, %v1544, %v1549
    %v1551 = vrot.slane %v1523, 2
    %v1552 = vsel %vm1532, %v1547, %v1551
    %v1561 = vpack.c.bf16 %v1540, %v1535
    %v1562 = vpack.c.bf16 %v1542, %v1538
    %v1563 = vpack.c.bf16 %v1550, %v1545
    %v1564 = vpack.c.bf16 %v1552, %v1548
    %s1565 = scalar_lea.vmem [#allocation9], 256
    %v1566 = vld [vmem:[%s1565] sm:$0xf]
    %v1567 = vld [vmem:[%s1565 + $0x4] sm:$0xf]
    %v1568 = vld [vmem:[%s1565 + $0x8] sm:$0xf]
    %v1569 = vld [vmem:[%s1565 + $0xc] sm:$0xf]
    %v1570 = vld [vmem:[%s1565 + $0x10] sm:$0xf]
    %v1571 = vld [vmem:[%s1565 + $0x14] sm:$0xf]
    %v1572 = vld [vmem:[%s1565 + $0x18] sm:$0xf]
    %v1573 = vld [vmem:[%s1565 + $0x1c] sm:$0xf]
    %v1574 = vld [vmem:[%s1565 + $0x20] sm:$0xf]
    %v1575 = vld [vmem:[%s1565 + $0x24] sm:$0xf]
    %v1576 = vld [vmem:[%s1565 + $0x28] sm:$0xf]
    %v1577 = vld [vmem:[%s1565 + $0x2c] sm:$0xf]
    %v1578 = vld [vmem:[%s1565 + $0x30] sm:$0xf]
    %v1579 = vld [vmem:[%s1565 + $0x34] sm:$0xf]
    %v1580 = vld [vmem:[%s1565 + $0x38] sm:$0xf]
    %v1581 = vld [vmem:[%s1565 + $0x3c] sm:$0xf]
    %v1582 = vld [vmem:[%s1565 + $0x40] sm:$0xf]
    %v1583 = vld [vmem:[%s1565 + $0x44] sm:$0xf]
    %v1584 = vld [vmem:[%s1565 + $0x48] sm:$0xf]
    %v1585 = vld [vmem:[%s1565 + $0x4c] sm:$0xf]
    %v1586 = vld [vmem:[%s1565 + $0x50] sm:$0xf]
    %v1587 = vld [vmem:[%s1565 + $0x54] sm:$0xf]
    %v1588 = vld [vmem:[%s1565 + $0x58] sm:$0xf]
    %v1589 = vld [vmem:[%s1565 + $0x5c] sm:$0xf]
    %v1590 = vld [vmem:[%s1565 + $0x60] sm:$0xf]
    %v1591 = vld [vmem:[%s1565 + $0x64] sm:$0xf]
    %v1592 = vld [vmem:[%s1565 + $0x68] sm:$0xf]
    %v1593 = vld [vmem:[%s1565 + $0x6c] sm:$0xf]
    %v1594 = vld [vmem:[%s1565 + $0x70] sm:$0xf]
    %v1595 = vld [vmem:[%s1565 + $0x74] sm:$0xf]
    %v1596 = vld [vmem:[%s1565 + $0x78] sm:$0xf]
    %v1597 = vld [vmem:[%s1565 + $0x7c] sm:$0xf]
    %v1630 = vunpack.c.l.b16 %v1566
    %v1631 = vunpack.c.l.b16 %v1567
    %v1632 = vunpack.c.l.b16 %v1568
    %v1633 = vunpack.c.l.b16 %v1569
    %v1634 = vunpack.c.l.b16 %v1570
    %v1635 = vunpack.c.l.b16 %v1571
    %v1636 = vunpack.c.l.b16 %v1572
    %v1637 = vunpack.c.l.b16 %v1573
    %v1638 = vunpack.c.l.b16 %v1574
    %v1639 = vunpack.c.l.b16 %v1575
    %v1640 = vunpack.c.l.b16 %v1576
    %v1641 = vunpack.c.l.b16 %v1577
    %v1642 = vunpack.c.l.b16 %v1578
    %v1643 = vunpack.c.l.b16 %v1579
    %v1644 = vunpack.c.l.b16 %v1580
    %v1645 = vunpack.c.l.b16 %v1581
    %v1646 = vunpack.c.l.b16 %v1582
    %v1647 = vunpack.c.l.b16 %v1583
    %v1648 = vunpack.c.l.b16 %v1584
    %v1649 = vunpack.c.l.b16 %v1585
    %v1650 = vunpack.c.l.b16 %v1586
    %v1651 = vunpack.c.l.b16 %v1587
    %v1652 = vunpack.c.l.b16 %v1588
    %v1653 = vunpack.c.l.b16 %v1589
    %v1654 = vunpack.c.l.b16 %v1590
    %v1655 = vunpack.c.l.b16 %v1591
    %v1656 = vunpack.c.l.b16 %v1592
    %v1657 = vunpack.c.l.b16 %v1593
    %v1658 = vunpack.c.l.b16 %v1594
    %v1659 = vunpack.c.l.b16 %v1595
    %v1660 = vunpack.c.l.b16 %v1596
    %v1661 = vunpack.c.l.b16 %v1597
    %v1662 = vpack.c.b16 %v1631, %v1630
    %v1663 = vpack.c.b16 %v1633, %v1632
    %v1664 = vpack.c.b16 %v1635, %v1634
    %v1665 = vpack.c.b16 %v1637, %v1636
    %v1666 = vpack.c.b16 %v1639, %v1638
    %v1667 = vpack.c.b16 %v1641, %v1640
    %v1668 = vpack.c.b16 %v1643, %v1642
    %v1669 = vpack.c.b16 %v1645, %v1644
    %v1670 = vpack.c.b16 %v1647, %v1646
    %v1671 = vpack.c.b16 %v1649, %v1648
    %v1672 = vpack.c.b16 %v1651, %v1650
    %v1673 = vpack.c.b16 %v1653, %v1652
    %v1674 = vpack.c.b16 %v1655, %v1654
    %v1675 = vpack.c.b16 %v1657, %v1656
    %v1676 = vpack.c.b16 %v1659, %v1658
    %v1677 = vpack.c.b16 %v1661, %v1660
    %1694 = vmatprep.subr.bf16.mxu0 0
    %1695 = vmatpush1.bf16.msra.mxu0 %v1662
    %1696 = vmatprep.subr.bf16.mxu0 0
    %1697 = vmatpush1.bf16.msra.mxu0 %v1663
    %1698 = vmatprep.subr.bf16.mxu0 0
    %1699 = vmatpush1.bf16.msra.mxu0 %v1664
    %1700 = vmatprep.subr.bf16.mxu0 0
    %1701 = vmatpush1.bf16.msra.mxu0 %v1665
    %1702 = vmatprep.subr.bf16.mxu0 0
    %1703 = vmatpush1.bf16.msra.mxu0 %v1666
    %1704 = vmatprep.subr.bf16.mxu0 0
    %1705 = vmatpush1.bf16.msra.mxu0 %v1667
    %1706 = vmatprep.subr.bf16.mxu0 0
    %1707 = vmatpush1.bf16.msra.mxu0 %v1668
    %1708 = vmatprep.subr.bf16.mxu0 0
    %1709 = vmatpush1.bf16.msra.mxu0 %v1669
    %1710 = vmatprep.subr.bf16.mxu0 0
    %1711 = vmatpush1.bf16.msra.mxu0 %v1670
    %1712 = vmatprep.subr.bf16.mxu0 0
    %1713 = vmatpush1.bf16.msra.mxu0 %v1671
    %1714 = vmatprep.subr.bf16.mxu0 0
    %1715 = vmatpush1.bf16.msra.mxu0 %v1672
    %1716 = vmatprep.subr.bf16.mxu0 0
    %1717 = vmatpush1.bf16.msra.mxu0 %v1673
    %1718 = vmatprep.subr.bf16.mxu0 0
    %1719 = vmatpush1.bf16.msra.mxu0 %v1674
    %1720 = vmatprep.subr.bf16.mxu0 0
    %1721 = vmatpush1.bf16.msra.mxu0 %v1675
    %1722 = vmatprep.subr.bf16.mxu0 0
    %1723 = vmatpush1.bf16.msra.mxu0 %v1676
    %1724 = vmatprep.subr.bf16.mxu0 0
    %1725 = vmatpush1.bf16.msra.mxu0 %v1677
    %1726 = vmatprep.mubr.bf16.mxu0 %v1562
    %1727 = vmatmul.mubr.bf16.gmra.mrb[0].mxu0 %v1561
    %v1728 = vpop.f32.mrb[0].mxu0
    %v1729 = vadd.f32 0.0, %v1728
    %v1730 = vpop.f32.mrb[0].mxu0
    %v1731 = vpop.f32.mrb[0].mxu0
    %v1732 = vadd.f32 0.0, %v1731
    %v1733 = vpop.f32.mrb[0].mxu0
    %1734 = vmatprep.mubr.bf16.mxu0 %v1564
    %1735 = vmatmul.mubr.bf16.gmra.mrb[0].mxu0 %v1563
    %v1736 = vpop.f32.mrb[0].mxu0
    %v1737 = vadd.f32 0.0, %v1736
    %v1738 = vpop.f32.mrb[0].mxu0
    %v1739 = vpop.f32.mrb[0].mxu0
    %v1740 = vadd.f32 0.0, %v1739
    %v1741 = vpop.f32.mrb[0].mxu0
    %1742 = vdwg.mxu0
    %v1743 = vadd.f32 %v1502, %v1729
    %v1744 = vadd.f32 %v1505, %v1732
    %v1745 = vadd.f32 %v1510, %v1737
    %v1746 = vadd.f32 %v1513, %v1740
    %v1747 = vadd.f32 %v1743, %v1744
    %v1748 = vadd.f32 %v1747, %v1745
    %v1749 = vadd.f32 %v1748, %v1746
    %v1750 = vrot.slane %v1749, 4
    %v1751 = vadd.f32 %v1749, %v1750
    %v1752 = vrot.slane %v1751, 2
    %v1753 = vadd.f32 %v1751, %v1752
    %v1754 = vrot.slane %v1753, 1
    %v1755 = vadd.f32 %v1753, %v1754
    %v1756 = vmul.f32 %v1743, %v1743
    %v1757 = vmul.f32 %v1744, %v1744
    %v1758 = vmul.f32 %v1745, %v1745
    %v1759 = vmul.f32 %v1746, %v1746
    %v1760 = vadd.f32 %v1756, %v1757
    %v1761 = vadd.f32 %v1760, %v1758
    %v1762 = vadd.f32 %v1761, %v1759
    %v1763 = vrot.slane %v1762, 4
    %v1764 = vadd.f32 %v1762, %v1763
    %v1765 = vrot.slane %v1764, 2
    %v1766 = vadd.f32 %v1764, %v1765
    %v1767 = vrot.slane %v1766, 1
    %v1768 = vadd.f32 %v1766, %v1767
    %1769 = vmatprep.subr.mxu0 0.0
    %1770 = vmatpush1.msra.mxu0 %v712
    %1771 = vmatprep.subr.mxu0 0.0
    %1772 = vmatpush1.msra.mxu0 %v713
    %1773 = vmatprep.subr.mxu0 0.0
    %1774 = vmatpush1.msra.mxu0 %v714
    %1775 = vmatprep.subr.mxu0 0.0
    %1776 = vmatpush1.msra.mxu0 %v715
    %1777 = vmatprep.subr.mxu0 0.0
    %1778 = vmatpush1.msra.mxu0 %v716
    %1779 = vmatprep.subr.mxu0 0.0
    %1780 = vmatpush1.msra.mxu0 %v717
    %1781 = vmatprep.subr.mxu0 0.0
    %1782 = vmatpush1.msra.mxu0 %v718
    %1783 = vmatprep.subr.mxu0 0.0
    %1784 = vmatpush1.msra.mxu0 %v719
    %1785 = vmatprep.subr.mxu0 0.0
    %1786 = vmatpush1.msra.mxu0 %v720
    %1787 = vmatprep.subr.mxu0 0.0
    %1788 = vmatpush1.msra.mxu0 %v721
    %1789 = vmatprep.subr.mxu0 0.0
    %1790 = vmatpush1.msra.mxu0 %v722
    %1791 = vmatprep.subr.mxu0 0.0
    %1792 = vmatpush1.msra.mxu0 %v723
    %1793 = vmatprep.subr.mxu0 0.0
    %1794 = vmatpush1.msra.mxu0 %v724
    %1795 = vmatprep.subr.mxu0 0.0
    %1796 = vmatpush1.msra.mxu0 %v725
    %1797 = vmatprep.subr.mxu0 0.0
    %1798 = vmatpush1.msra.mxu0 %v726
    %1799 = vmatprep.subr.mxu0 0.0
    %1800 = vmatpush1.msra.mxu0 %v727
    %1801 = vmatprep.subr.mxu0 0.0
    %1802 = vmatpush1.msra.mxu0 0.0
    %1803 = vmatprep.subr.mxu0 0.0
    %1804 = vmatpush1.msra.mxu0 0.0
    %1805 = vmatprep.subr.mxu0 0.0
    %1806 = vmatpush1.msra.mxu0 0.0
    %1807 = vmatprep.subr.mxu0 0.0
    %1808 = vmatpush1.msra.mxu0 0.0
    %1809 = vmatprep.subr.mxu0 0.0
    %1810 = vmatpush1.msra.mxu0 0.0
    %1811 = vmatprep.subr.mxu0 0.0
    %1812 = vmatpush1.msra.mxu0 0.0
    %1813 = vmatprep.subr.mxu0 0.0
    %1814 = vmatpush1.msra.mxu0 0.0
    %1815 = vmatprep.subr.mxu0 0.0
    %1816 = vmatpush1.msra.mxu0 0.0
    %1817 = vmatprep.subr.mxu0 0.0
    %1818 = vmatpush1.msra.mxu0 0.0
    %1819 = vmatprep.subr.mxu0 0.0
    %1820 = vmatpush1.msra.mxu0 0.0
    %1821 = vmatprep.subr.mxu0 0.0
    %1822 = vmatpush1.msra.mxu0 0.0
    %1823 = vmatprep.subr.mxu0 0.0
    %1824 = vmatpush1.msra.mxu0 0.0
    %1825 = vmatprep.subr.mxu0 0.0
    %1826 = vmatpush1.msra.mxu0 0.0
    %1827 = vmatprep.subr.mxu0 0.0
    %1828 = vmatpush1.msra.mxu0 0.0
    %1829 = vmatprep.subr.mxu0 0.0
    %1830 = vmatpush1.msra.mxu0 0.0
    %1831 = vmatprep.subr.mxu0 0.0
    %1832 = vmatpush1.msra.mxu0 0.0
    %1833 = vmatprep.mubr.f32.mxu0 0.0
    %1834 = vmatmul.mubr.f32.gmra.mrb[0].mxu0 %v1755
    %v1835 = vpop.f32.mrb[0].mxu0
    %v1836 = vadd.f32 0.0, %v1835
    %v1837 = vpop.f32.mrb[0].mxu0
    %1838 = vdwg.mxu0
    %1839 = vmatprep.subr.mxu0 0.0
    %1840 = vmatpush1.msra.mxu0 %v712
    %1841 = vmatprep.subr.mxu0 0.0
    %1842 = vmatpush1.msra.mxu0 %v713
    %1843 = vmatprep.subr.mxu0 0.0
    %1844 = vmatpush1.msra.mxu0 %v714
    %1845 = vmatprep.subr.mxu0 0.0
    %1846 = vmatpush1.msra.mxu0 %v715
    %1847 = vmatprep.subr.mxu0 0.0
    %1848 = vmatpush1.msra.mxu0 %v716
    %1849 = vmatprep.subr.mxu0 0.0
    %1850 = vmatpush1.msra.mxu0 %v717
    %1851 = vmatprep.subr.mxu0 0.0
    %1852 = vmatpush1.msra.mxu0 %v718
    %1853 = vmatprep.subr.mxu0 0.0
    %1854 = vmatpush1.msra.mxu0 %v719
    %1855 = vmatprep.subr.mxu0 0.0
    %1856 = vmatpush1.msra.mxu0 %v720
    %1857 = vmatprep.subr.mxu0 0.0
    %1858 = vmatpush1.msra.mxu0 %v721
    %1859 = vmatprep.subr.mxu0 0.0
    %1860 = vmatpush1.msra.mxu0 %v722
    %1861 = vmatprep.subr.mxu0 0.0
    %1862 = vmatpush1.msra.mxu0 %v723
    %1863 = vmatprep.subr.mxu0 0.0
    %1864 = vmatpush1.msra.mxu0 %v724
    %1865 = vmatprep.subr.mxu0 0.0
    %1866 = vmatpush1.msra.mxu0 %v725
    %1867 = vmatprep.subr.mxu0 0.0
    %1868 = vmatpush1.msra.mxu0 %v726
    %1869 = vmatprep.subr.mxu0 0.0
    %1870 = vmatpush1.msra.mxu0 %v727
    %1871 = vmatprep.subr.mxu0 0.0
    %1872 = vmatpush1.msra.mxu0 0.0
    %1873 = vmatprep.subr.mxu0 0.0
    %1874 = vmatpush1.msra.mxu0 0.0
    %1875 = vmatprep.subr.mxu0 0.0
    %1876 = vmatpush1.msra.mxu0 0.0
    %1877 = vmatprep.subr.mxu0 0.0
    %1878 = vmatpush1.msra.mxu0 0.0
    %1879 = vmatprep.subr.mxu0 0.0
    %1880 = vmatpush1.msra.mxu0 0.0
    %1881 = vmatprep.subr.mxu0 0.0
    %1882 = vmatpush1.msra.mxu0 0.0
    %1883 = vmatprep.subr.mxu0 0.0
    %1884 = vmatpush1.msra.mxu0 0.0
    %1885 = vmatprep.subr.mxu0 0.0
    %1886 = vmatpush1.msra.mxu0 0.0
    %1887 = vmatprep.subr.mxu0 0.0
    %1888 = vmatpush1.msra.mxu0 0.0
    %1889 = vmatprep.subr.mxu0 0.0
    %1890 = vmatpush1.msra.mxu0 0.0
    %1891 = vmatprep.subr.mxu0 0.0
    %1892 = vmatpush1.msra.mxu0 0.0
    %1893 = vmatprep.subr.mxu0 0.0
    %1894 = vmatpush1.msra.mxu0 0.0
    %1895 = vmatprep.subr.mxu0 0.0
    %1896 = vmatpush1.msra.mxu0 0.0
    %1897 = vmatprep.subr.mxu0 0.0
    %1898 = vmatpush1.msra.mxu0 0.0
    %1899 = vmatprep.subr.mxu0 0.0
    %1900 = vmatpush1.msra.mxu0 0.0
    %1901 = vmatprep.subr.mxu0 0.0
    %1902 = vmatpush1.msra.mxu0 0.0
    %1903 = vmatprep.mubr.f32.mxu0 0.0
    %1904 = vmatmul.mubr.f32.gmra.mrb[0].mxu0 %v1768
    %v1905 = vpop.f32.mrb[0].mxu0
    %v1906 = vadd.f32 0.0, %v1905
    %v1907 = vpop.f32.mrb[0].mxu0
    %1908 = vdwg.mxu0
    %v1909 = vmul.f32 %v1836, 0.001953125
    %v1910 = vmul.f32 %v1906, 0.001953125
    %v1911 = vmul.f32 %v1909, %v1909
    %v1912 = vsub.f32 %v1910, %v1911
    %v1913 = vld [vmem:[%s5] sm:$0x1]
    %v1914 = vadd.f32 %v1912, 1e-05
    %v1915 = vrsqrt.pop %v1914
    %v1916 = vmul.f32 %v1913, %v1915
    %v1917 = vld [vmem:[%s6] sm:$0x1]
    %v1918 = vmul.f32 %v1909, %v1916
    %v1919 = vsub.f32 %v1917, %v1918
    %v1921 = vsel %vm894, %v1916, 0
    %1923 = vmatprep.subr.mxu0 0.0
    %1924 = vmatpush1.msra.mxu0 %v893
    %1925 = vmatprep.subr.mxu0 0.0
    %1926 = vmatpush1.msra.mxu0 0.0
    %1927 = vmatprep.subr.mxu0 0.0
    %1928 = vmatpush1.msra.mxu0 0.0
    %1929 = vmatprep.subr.mxu0 0.0
    %1930 = vmatpush1.msra.mxu0 0.0
    %1931 = vmatprep.subr.mxu0 0.0
    %1932 = vmatpush1.msra.mxu0 0.0
    %1933 = vmatprep.subr.mxu0 0.0
    %1934 = vmatpush1.msra.mxu0 0.0
    %1935 = vmatprep.subr.mxu0 0.0
    %1936 = vmatpush1.msra.mxu0 0.0
    %1937 = vmatprep.subr.mxu0 0.0
    %1938 = vmatpush1.msra.mxu0 0.0
    %1939 = vmatprep.subr.mxu0 0.0
    %1940 = vmatpush1.msra.mxu0 0.0
    %1941 = vmatprep.subr.mxu0 0.0
    %1942 = vmatpush1.msra.mxu0 0.0
    %1943 = vmatprep.subr.mxu0 0.0
    %1944 = vmatpush1.msra.mxu0 0.0
    %1945 = vmatprep.subr.mxu0 0.0
    %1946 = vmatpush1.msra.mxu0 0.0
    %1947 = vmatprep.subr.mxu0 0.0
    %1948 = vmatpush1.msra.mxu0 0.0
    %1949 = vmatprep.subr.mxu0 0.0
    %1950 = vmatpush1.msra.mxu0 0.0
    %1951 = vmatprep.subr.mxu0 0.0
    %1952 = vmatpush1.msra.mxu0 0.0
    %1953 = vmatprep.subr.mxu0 0.0
    %1954 = vmatpush1.msra.mxu0 0.0
    %1955 = vmatprep.subr.mxu0 0.0
    %1956 = vmatpush1.msra.mxu0 0.0
    %1957 = vmatprep.subr.mxu0 0.0
    %1958 = vmatpush1.msra.mxu0 0.0
    %1959 = vmatprep.subr.mxu0 0.0
    %1960 = vmatpush1.msra.mxu0 0.0
    %1961 = vmatprep.subr.mxu0 0.0
    %1962 = vmatpush1.msra.mxu0 0.0
    %1963 = vmatprep.subr.mxu0 0.0
    %1964 = vmatpush1.msra.mxu0 0.0
    %1965 = vmatprep.subr.mxu0 0.0
    %1966 = vmatpush1.msra.mxu0 0.0
    %1967 = vmatprep.subr.mxu0 0.0
    %1968 = vmatpush1.msra.mxu0 0.0
    %1969 = vmatprep.subr.mxu0 0.0
    %1970 = vmatpush1.msra.mxu0 0.0
    %1971 = vmatprep.subr.mxu0 0.0
    %1972 = vmatpush1.msra.mxu0 0.0
    %1973 = vmatprep.subr.mxu0 0.0
    %1974 = vmatpush1.msra.mxu0 0.0
    %1975 = vmatprep.subr.mxu0 0.0
    %1976 = vmatpush1.msra.mxu0 0.0
    %1977 = vmatprep.subr.mxu0 0.0
    %1978 = vmatpush1.msra.mxu0 0.0
    %1979 = vmatprep.subr.mxu0 0.0
    %1980 = vmatpush1.msra.mxu0 0.0
    %1981 = vmatprep.subr.mxu0 0.0
    %1982 = vmatpush1.msra.mxu0 0.0
    %1983 = vmatprep.subr.mxu0 0.0
    %1984 = vmatpush1.msra.mxu0 0.0
    %1985 = vmatprep.subr.mxu0 0.0
    %1986 = vmatpush1.msra.mxu0 0.0
    %1987 = vmatprep.mubr.f32.mxu0 0.0
    %1988 = vmatmul.mubr.f32.gmra.mrb[0].mxu0 %v1921
    %v1989 = vpop.f32.mrb[0].mxu0
    %v1990 = vadd.f32 0.0, %v1989
    %v1991 = vpop.f32.mrb[0].mxu0
    %1992 = vdwg.mxu0
    %v1994 = vsel %vm894, %v1919, 0
    %1996 = vmatprep.subr.mxu0 0.0
    %1997 = vmatpush1.msra.mxu0 %v893
    %1998 = vmatprep.subr.mxu0 0.0
    %1999 = vmatpush1.msra.mxu0 0.0
    %2000 = vmatprep.subr.mxu0 0.0
    %2001 = vmatpush1.msra.mxu0 0.0
    %2002 = vmatprep.subr.mxu0 0.0
    %2003 = vmatpush1.msra.mxu0 0.0
    %2004 = vmatprep.subr.mxu0 0.0
    %2005 = vmatpush1.msra.mxu0 0.0
    %2006 = vmatprep.subr.mxu0 0.0
    %2007 = vmatpush1.msra.mxu0 0.0
    %2008 = vmatprep.subr.mxu0 0.0
    %2009 = vmatpush1.msra.mxu0 0.0
    %2010 = vmatprep.subr.mxu0 0.0
    %2011 = vmatpush1.msra.mxu0 0.0
    %2012 = vmatprep.subr.mxu0 0.0
    %2013 = vmatpush1.msra.mxu0 0.0
    %2014 = vmatprep.subr.mxu0 0.0
    %2015 = vmatpush1.msra.mxu0 0.0
    %2016 = vmatprep.subr.mxu0 0.0
    %2017 = vmatpush1.msra.mxu0 0.0
    %2018 = vmatprep.subr.mxu0 0.0
    %2019 = vmatpush1.msra.mxu0 0.0
    %2020 = vmatprep.subr.mxu0 0.0
    %2021 = vmatpush1.msra.mxu0 0.0
    %2022 = vmatprep.subr.mxu0 0.0
    %2023 = vmatpush1.msra.mxu0 0.0
    %2024 = vmatprep.subr.mxu0 0.0
    %2025 = vmatpush1.msra.mxu0 0.0
    %2026 = vmatprep.subr.mxu0 0.0
    %2027 = vmatpush1.msra.mxu0 0.0
    %2028 = vmatprep.subr.mxu0 0.0
    %2029 = vmatpush1.msra.mxu0 0.0
    %2030 = vmatprep.subr.mxu0 0.0
    %2031 = vmatpush1.msra.mxu0 0.0
    %2032 = vmatprep.subr.mxu0 0.0
    %2033 = vmatpush1.msra.mxu0 0.0
    %2034 = vmatprep.subr.mxu0 0.0
    %2035 = vmatpush1.msra.mxu0 0.0
    %2036 = vmatprep.subr.mxu0 0.0
    %2037 = vmatpush1.msra.mxu0 0.0
    %2038 = vmatprep.subr.mxu0 0.0
    %2039 = vmatpush1.msra.mxu0 0.0
    %2040 = vmatprep.subr.mxu0 0.0
    %2041 = vmatpush1.msra.mxu0 0.0
    %2042 = vmatprep.subr.mxu0 0.0
    %2043 = vmatpush1.msra.mxu0 0.0
    %2044 = vmatprep.subr.mxu0 0.0
    %2045 = vmatpush1.msra.mxu0 0.0
    %2046 = vmatprep.subr.mxu0 0.0
    %2047 = vmatpush1.msra.mxu0 0.0
    %2048 = vmatprep.subr.mxu0 0.0
    %2049 = vmatpush1.msra.mxu0 0.0
    %2050 = vmatprep.subr.mxu0 0.0
    %2051 = vmatpush1.msra.mxu0 0.0
    %2052 = vmatprep.subr.mxu0 0.0
    %2053 = vmatpush1.msra.mxu0 0.0
    %2054 = vmatprep.subr.mxu0 0.0
    %2055 = vmatpush1.msra.mxu0 0.0
    %2056 = vmatprep.subr.mxu0 0.0
    %2057 = vmatpush1.msra.mxu0 0.0
    %2058 = vmatprep.subr.mxu0 0.0
    %2059 = vmatpush1.msra.mxu0 0.0
    %2060 = vmatprep.mubr.f32.mxu0 0.0
    %2061 = vmatmul.mubr.f32.gmra.mrb[0].mxu0 %v1994
    %v2062 = vpop.f32.mrb[0].mxu0
    %v2063 = vadd.f32 0.0, %v2062
    %v2064 = vpop.f32.mrb[0].mxu0
    %2065 = vdwg.mxu0
    %v2066 = vlaneseq
    %v2067 = vshrl.u32 %v2066, 7
    %v2068 = vsub.s32 0, %v2067
    %v2069 = vrot.slane %v1990, %v2068
    %v2070 = vmul.f32 %v1743, %v2069
    %v2071 = vmul.f32 %v1744, %v2069
    %v2072 = vmul.f32 %v1745, %v2069
    %v2073 = vmul.f32 %v1746, %v2069
    %v2074 = vlaneseq
    %v2075 = vshrl.u32 %v2074, 7
    %v2076 = vsub.s32 0, %v2075
    %v2077 = vrot.slane %v2063, %v2076
    %v2078 = vadd.f32 %v2070, %v2077
    %v2079 = vadd.f32 %v2071, %v2077
    %v2080 = vadd.f32 %v2072, %v2077
    %v2081 = vadd.f32 %v2073, %v2077
    %v2082 = vmax.f32 %v2078, 0.0
    %v2083 = vmax.f32 %v2079, 0.0
    %v2084 = vmax.f32 %v2080, 0.0
    %v2085 = vmax.f32 %v2081, 0.0
    %2086 = vst [vmem:[#allocation10] sm:$0xff] %v2082
    %2087 = vst [vmem:[#allocation10 + $0x8] sm:$0xff] %v2083
    %2088 = vst [vmem:[#allocation10 + $0x10] sm:$0xff] %v2084
    %2089 = vst [vmem:[#allocation10 + $0x18] sm:$0xff] %v2085
    // Predicated region
    $region42: #{tpu_custom_call.1} parent=1 // pred_check
      _
    $region43: #{tpu_custom_call.1} parent=1 // pred_check_branch
      %2091 = sbr.rel (0) target = $region45
    $region44: #{tpu_custom_call.1} parent=1 // pred_region
      %s2093 = ssub.s32 512, 512
      %2094 = vsyncadd [#allocation6], %s2093
      %s2095 = sshll.u32 [#allocation10], 4
      %s2096 = int_to_ptr.vmem [resolvable:$true] %s2095
      %2101 = dma.vmem_to_hbm [thread:$0]  %s2096, 512, %s7, [#allocation6], 128, 128, 8
    $region45: #{tpu_custom_call.1} parent=1 // pred_fallthru
      _
    // Predicated region
    $region46: #{tpu_custom_call.1} parent=1 // pred_check
      _
    $region47: #{tpu_custom_call.1} parent=1 // pred_check_branch
      %2103 = sbr.rel (0) target = $region49
    $region48: #{tpu_custom_call.1} parent=1 // pred_region
      %2104 = dma.done [#allocation6], 512
    $region49: #{tpu_custom_call.1} parent=1 // pred_fallthru
      _
    %2105 = vsyncpa [#allocation5], 1
    %2106 = vsyncpa [#allocation8], 1
    %2107 = vsyncpa [#allocation6], 1

</llo_original>
